<compile_context>
chip_gen: v6e
topology: v6e:2x2x1
jax: 0.10.0
libtpu: 0.0.40
codegen_flags: <defaults>
</compile_context>

<pallas_src>
import jax
import jax.numpy as jnp
from jax.experimental import pallas as pl
from jax.experimental.pallas import tpu as pltpu


# ----------------------------- helpers ------------------------------------- #

def _round_up(n, m):
    return ((n + m - 1) // m) * m


def _vmem_capacity_bytes():
    """Physical VMEM per core (128 MiB v5e/v6e, 64 MiB v7x); safe fallback."""
    try:
        info = pltpu.get_tpu_info()
        for attr in ("vmem_capacity_bytes", "vmem_bytes", "vmem_size_bytes"):
            v = getattr(info, attr, None)
            if v:
                return int(v)
    except Exception:
        pass
    return 64 * 1024 * 1024  # conservative (v7x per-core VMEM)


def _fused_vmem_bytes(t_blk, btile, inp, hp, op):
    """Rough VMEM footprint of one grid step of the fused kernel."""
    stream = 2 * t_blk * btile * (inp + hp + op) * 4   # x in + rnn_out/y out (dbl buf)
    resident = (inp * hp + hp * op + hp + op) * 4 + hp * hp * 2  # f32 + bf16 W_hh
    scratch = btile * hp * 4                           # carried hidden state
    temps = t_blk * btile * hp * 4                     # xproj / head temporaries
    return stream + resident + scratch + temps


def _choose_time_block(seq, btile, inp, hp, op, budget):
    """Largest time block that fits the VMEM budget (whole seq if small)."""
    if seq <= 128 and _fused_vmem_bytes(seq, btile, inp, hp, op) <= budget:
        return seq
    for tb in (64, 32, 16, 8, 4, 2, 1):
        if tb < seq and _fused_vmem_bytes(tb, btile, inp, hp, op) <= budget:
            return tb
    return 1


# ------------------------------ fused kernel -------------------------------- #

def _make_fused_kernel(unroll):
    def kernel(x_ref, w_ih_ref, b_rnn_ref, w_hh_ref, w_out_ref, b_out_ref,
               rnn_out_ref, y_ref, h_ref):
        # New batch shard (time is the inner grid axis): hidden=None in the
        # PyTorch module -> zero initial hidden state.
        @pl.when(pl.program_id(1) == 0)
        def _():
            h_ref[...] = jnp.zeros_like(h_ref)

        # (1) Input projection for the whole time block -- one MXU contraction,
        #     off the serial path.  Staged into the rnn_out output buffer
        #     (re-used as VMEM scratch; each slot is read before it is
        #     overwritten by the recurrence below).
        xproj = jnp.einsum(
            "tbi,ih->tbh", x_ref[...], w_ih_ref[...],
            preferred_element_type=jnp.float32) + b_rnn_ref[...]
        rnn_out_ref[...] = xproj

        # (2) Serial recurrence: only tanh + h @ W_hh^T per timestep.  W_hh is
        #     bf16 (f32 accumulation via preferred_element_type); the add and
        #     tanh stay f32.
        w_hh = w_hh_ref[...]   # resident across the unrolled steps

        def step(t, h):
            h_new = jnp.tanh(
                rnn_out_ref[t]                               # xproj_t (staged)
                + jnp.dot(h.astype(w_hh.dtype), w_hh,
                          preferred_element_type=jnp.float32))
            rnn_out_ref[t] = h_new
            return h_new

        h_ref[...] = jax.lax.fori_loop(0, x_ref.shape[0], step, h_ref[...],
                                       unroll=unroll)

        # (3) Output head for the whole block -- fused here so rnn_out is never
        #     re-read from HBM and no third kernel launch is needed.
        y_ref[...] = jnp.einsum(
            "tbh,ho->tbo", rnn_out_ref[...], w_out_ref[...],
            preferred_element_type=jnp.float32) + b_out_ref[...]

    return kernel


# ------------------------------- wrapper ------------------------------------ #

def simple_recurrent_forward(x, params, *, recurrent_dtype=jnp.bfloat16,
                             single_buffer_weights=True):
    """x: (S, B, I) float32 (time-major, PyTorch nn.RNN default layout).

    Returns (y, rnn_out) like the PyTorch module's forward (hidden=None).
    """
    S, B, I = x.shape
    H = params["w_hh"].shape[0]
    O = params["w_out"].shape[0]

    # vreg/MXU-friendly padding: batch -> sublane multiple, H/O -> lane multiple.
    Bp = _round_up(B, 8)
    Hp = _round_up(H, 128)
    Op = _round_up(O, 128)

    # Batch sharding: 2 shards when the batch is large enough, so the leading
    # "parallel" grid axis can be split across v7x's two TensorCores.
    if Bp >= 16 and Bp % 16 == 0:
        Btile = Bp // 2
    else:
        Btile = Bp
    nb = Bp // Btile

    # VMEM-budgeted time block (re-derives automatically for v7x's 64 MiB).
    budget = int(0.75 * _vmem_capacity_bytes())
    t_blk = _choose_time_block(S, Btile, I, Hp, Op, budget)
    Sp = _round_up(S, t_blk)      # END-padding only (padded steps are sliced off)
    nt = Sp // t_blk

    # Glue: transpose + zero-pad weights once; fold the two RNN biases together.
    # The recurrent weight is cast to bf16 once (serial-path matmul); the
    # input/output projections stay f32 (off the serial path, VMEM-resident).
    w_ih_t = jnp.zeros((I, Hp), jnp.float32).at[:, :H].set(params["w_ih"].T)
    w_hh_t = (jnp.zeros((Hp, Hp), jnp.float32)
              .at[:H, :H].set(params["w_hh"].T).astype(recurrent_dtype))
    w_out_t = jnp.zeros((Hp, Op), jnp.float32).at[:H, :O].set(params["w_out"].T)
    b_rnn = jnp.zeros((1, Hp), jnp.float32).at[0, :H].set(
        params["b_ih"] + params["b_hh"])
    b_out = jnp.zeros((1, Op), jnp.float32).at[0, :O].set(params["b_out"])

    x_pad = jnp.zeros((Sp, Bp, I), jnp.float32).at[:S, :B, :].set(x)

    # vreg-pressure guard for the unrolled serial loop: the carried h needs
    # (Btile/8)*(Hp/128) vregs; drop to a partial unroll when it gets large.
    h_vregs = max(1, Btile // 8) * max(1, Hp // 128)
    unroll = True if (h_vregs <= 16 and t_blk <= 32) else min(t_blk, 8)

    def resident(shape):
        # Constant-index blocks: single-buffer them to halve their VMEM cost.
        kw = {"pipeline_mode": pl.Buffered(1)} if single_buffer_weights else {}
        return pl.BlockSpec(shape, lambda b, t: (0,) * len(shape), **kw)

    rnn_out_pad, y_pad = pl.pallas_call(
        _make_fused_kernel(unroll),
        out_shape=(jax.ShapeDtypeStruct((Sp, Bp, Hp), jnp.float32),
                   jax.ShapeDtypeStruct((Sp, Bp, Op), jnp.float32)),
        grid_spec=pltpu.PrefetchScalarGridSpec(
            num_scalar_prefetch=0,
            grid=(nb, nt),                       # (batch shards, time blocks)
            in_specs=[
                pl.BlockSpec((t_blk, Btile, I), lambda b, t: (t, b, 0)),  # x
                resident((I, Hp)),               # W_ih^T   (f32)
                resident((1, Hp)),               # b_ih+b_hh (f32)
                resident((Hp, Hp)),              # W_hh^T   (bf16)
                resident((Hp, Op)),              # W_out^T  (f32)
                resident((1, Op)),               # b_out    (f32)
            ],
            out_specs=[
                pl.BlockSpec((t_blk, Btile, Hp), lambda b, t: (t, b, 0)),
                pl.BlockSpec((t_blk, Btile, Op), lambda b, t: (t, b, 0)),
            ],
            scratch_shapes=[pltpu.VMEM((Btile, Hp), jnp.float32)],  # carried h
        ),
        compiler_params=pltpu.CompilerParams(
            dimension_semantics=("parallel", "arbitrary"),
            vmem_limit_bytes=budget,
        ),
    )(x_pad, w_ih_t, b_rnn, w_hh_t, w_out_t, b_out)

    rnn_out = rnn_out_pad[:S, :B, :H]
    y = y_pad[:S, :B, :O]
    return y, rnn_out


# ------------------------------ reference ----------------------------------- #

def _reference_forward(x, params):
    """Pure-JAX reference (lax.scan) matching PyTorch nn.RNN(tanh) + Linear."""
    def step(h, x_t):
        h_new = jnp.tanh(x_t @ params["w_ih"].T + params["b_ih"]
                         + h @ params["w_hh"].T + params["b_hh"])
        return h_new, h_new

    B = x.shape[1]
    H = params["w_hh"].shape[0]
    h0 = jnp.zeros((B, H), jnp.float32)
    _, rnn_out = jax.lax.scan(step, h0, x)
    y = rnn_out @ params["w_out"].T + params["b_out"]
    return y, rnn_out


if __name__ == "__main__":
    # Small shapes consistent with the module: seq=8, batch=4, in=16, hidden=32, out=8
    S, B, I, H, O = 8, 4, 16, 32, 8

    key = jax.random.PRNGKey(0)
    k = jax.random.split(key, 8)
    x = jax.random.normal(k[0], (S, B, I), jnp.float32)

    # Deterministic parameter init (uniform, roughly PyTorch-scale 1/sqrt(H))
    scale = 1.0 / jnp.sqrt(jnp.float32(H))
    params = {
        "w_ih":  jax.random.uniform(k[1], (H, I), jnp.float32, -scale, scale),
        "w_hh":  jax.random.uniform(k[2], (H, H), jnp.float32, -scale, scale),
        "b_ih":  jax.random.uniform(k[3], (H,),   jnp.float32, -scale, scale),
        "b_hh":  jax.random.uniform(k[4], (H,),   jnp.float32, -scale, scale),
        "w_out": jax.random.uniform(k[5], (O, H), jnp.float32, -scale, scale),
        "b_out": jax.random.uniform(k[6], (O,),   jnp.float32, -scale, scale),
    }

    def run(recurrent_dtype, single_buffer):
        y, r = simple_recurrent_forward(
            x, params, recurrent_dtype=recurrent_dtype,
            single_buffer_weights=single_buffer)
        return jax.block_until_ready(y), jax.block_until_ready(r)

    def run_with_fallback(recurrent_dtype):
        try:
            return run(recurrent_dtype, True)
        except Exception:
            # Some JAX versions may reject single-buffered (Buffered(1))
            # resident blocks; fall back to default double-buffering.
            return run(recurrent_dtype, False)

    y_ref, rnn_ref = _reference_forward(x, params)

    # Performance default: bf16 recurrent weight (f32 accumulate + f32 tanh).
    # bf16 operand rounding bounds the error well below 2e-2 at these shapes.
    y, rnn_out = run_with_fallback(jnp.bfloat16)
    assert jnp.allclose(rnn_out, rnn_ref, atol=2e-2, rtol=2e-2)
    assert jnp.allclose(y, y_ref, atol=2e-2, rtol=2e-2)

    # Structural check at full f32 against the exact reference.
    y32, rnn32 = run_with_fallback(jnp.float32)
    assert jnp.allclose(rnn32, rnn_ref, atol=1e-4, rtol=1e-4)
    assert jnp.allclose(y32, y_ref, atol=1e-4, rtol=1e-4)

    print("KERNEL_OK")
</pallas_src>

<mosaic_0001>
module attributes {stable_mosaic.version = 11 : i64} {
  func.func @kernel(%arg0: i32, %arg1: i32, %arg2: memref<8x8x16xf32, #tpu.memory_space<vmem>>, %arg3: memref<16x128xf32, #tpu.memory_space<vmem>>, %arg4: memref<1x128xf32, #tpu.memory_space<vmem>>, %arg5: memref<128x128xbf16, #tpu.memory_space<vmem>>, %arg6: memref<128x128xf32, #tpu.memory_space<vmem>>, %arg7: memref<1x128xf32, #tpu.memory_space<vmem>>, %arg8: memref<8x8x128xf32, #tpu.memory_space<vmem>>, %arg9: memref<8x8x128xf32, #tpu.memory_space<vmem>>, %arg10: memref<8x128xf32, #tpu.memory_space<vmem>>) attributes {dimension_semantics = [#tpu.dimension_semantics<parallel>, #tpu.dimension_semantics<arbitrary>], iteration_bounds = array<i64: 1, 1>, scalar_prefetch = 0 : i64, scratch_operands = 1 : i64, tpu.core_type = #tpu.core_type<tc>, window_params = [{transform_indices = @transform_0, window_bounds = array<i64: 8, 8, 16>}, {pipeline_mode = #tpu.pipeline_mode<synchronous>, transform_indices = @transform_1, window_bounds = array<i64: 16, 128>}, {pipeline_mode = #tpu.pipeline_mode<synchronous>, transform_indices = @transform_2, window_bounds = array<i64: 1, 128>}, {pipeline_mode = #tpu.pipeline_mode<synchronous>, transform_indices = @transform_3, window_bounds = array<i64: 128, 128>}, {pipeline_mode = #tpu.pipeline_mode<synchronous>, transform_indices = @transform_4, window_bounds = array<i64: 128, 128>}, {pipeline_mode = #tpu.pipeline_mode<synchronous>, transform_indices = @transform_5, window_bounds = array<i64: 1, 128>}, {transform_indices = @transform_6, window_bounds = array<i64: 8, 8, 128>}, {transform_indices = @transform_7, window_bounds = array<i64: 8, 8, 128>}]} {
    %c0_i32 = arith.constant 0 : i32
    %0 = arith.cmpi eq, %arg1, %c0_i32 : i32
    %1 = arith.extui %0 : i1 to i32
    %c0_i32_0 = arith.constant 0 : i32
    %2 = arith.cmpi ne, %1, %c0_i32_0 : i32
    scf.if %2 {
      %cst_68 = arith.constant 0.000000e+00 : f32
      %110 = vector.broadcast %cst_68 : f32 to vector<8x128xf32>
      %c0_69 = arith.constant 0 : index
      %c0_70 = arith.constant 0 : index
      %111 = vector.load %arg10[%c0_69, %c0_70] : memref<8x128xf32, #tpu.memory_space<vmem>>, vector<8x128xf32>
      tpu.vector_store %arg10[%c0_69, %c0_70], %110 {strides = array<i32>} : memref<8x128xf32, #tpu.memory_space<vmem>>, vector<8x128xf32>,
    } else {
    }
    %c0 = arith.constant 0 : index
    %c0_1 = arith.constant 0 : index
    %c0_2 = arith.constant 0 : index
    %3 = vector.load %arg2[%c0, %c0_1, %c0_2] : memref<8x8x16xf32, #tpu.memory_space<vmem>>, vector<8x8x16xf32>
    %c0_3 = arith.constant 0 : index
    %c0_4 = arith.constant 0 : index
    %4 = vector.load %arg3[%c0_3, %c0_4] : memref<16x128xf32, #tpu.memory_space<vmem>>, vector<16x128xf32>
    "tpu.trace_start"() <{level = 10 : i32, message = "tbi,ih->tbh"}> : () -> ()
    %cst = arith.constant dense<0.000000e+00> : vector<8x8x128xf32>
    %5 = tpu.matmul %3, %4, %cst {dimension_numbers = #tpu.dot_dimension_numbers<[2], [0], [0, 1], [1], [0, 0, 0, 1, 1, 1], [], []>} : vector<8x8x16xf32>, vector<16x128xf32>, vector<8x8x128xf32> -> vector<8x8x128xf32>
    "tpu.trace_stop"() : () -> ()
    %c0_5 = arith.constant 0 : index
    %c0_6 = arith.constant 0 : index
    %6 = vector.load %arg4[%c0_5, %c0_6] : memref<1x128xf32, #tpu.memory_space<vmem>>, vector<1x128xf32>
    %7 = vector.shape_cast %6 : vector<1x128xf32> to vector<1x1x128xf32>
    %8 = vector.broadcast %7 : vector<1x1x128xf32> to vector<8x8x128xf32>
    %9 = arith.addf %5, %8 : vector<8x8x128xf32>
    %c0_7 = arith.constant 0 : index
    %c0_8 = arith.constant 0 : index
    %c0_9 = arith.constant 0 : index
    %10 = vector.load %arg8[%c0_7, %c0_8, %c0_9] : memref<8x8x128xf32, #tpu.memory_space<vmem>>, vector<8x8x128xf32>
    tpu.vector_store %arg8[%c0_7, %c0_8, %c0_9], %9 {strides = array<i32>} : memref<8x8x128xf32, #tpu.memory_space<vmem>>, vector<8x8x128xf32>,
    %c0_10 = arith.constant 0 : index
    %c0_11 = arith.constant 0 : index
    %11 = vector.load %arg5[%c0_10, %c0_11] : memref<128x128xbf16, #tpu.memory_space<vmem>>, vector<128x128xbf16>
    %c0_12 = arith.constant 0 : index
    %c0_13 = arith.constant 0 : index
    %12 = vector.load %arg10[%c0_12, %c0_13] : memref<8x128xf32, #tpu.memory_space<vmem>>, vector<8x128xf32>
    %c0_i32_14 = arith.constant 0 : i32
    %13 = arith.index_cast %c0_i32_14 : i32 to index
    %c0_15 = arith.constant 0 : index
    %c0_16 = arith.constant 0 : index
    %14 = vector.load %arg8[%13, %c0_15, %c0_16] : memref<8x8x128xf32, #tpu.memory_space<vmem>>, vector<1x8x128xf32>
    %15 = vector.shape_cast %14 : vector<1x8x128xf32> to vector<8x128xf32>
    %16 = arith.truncf %12 : vector<8x128xf32> to vector<8x128xbf16>
    %cst_17 = arith.constant dense<0.000000e+00> : vector<8x128xf32>
    %17 = tpu.matmul %16, %11, %cst_17 {dimension_numbers = #tpu.dot_dimension_numbers<[1], [0], [0], [1], [0, 0, 1, 1], [], []>} : vector<8x128xbf16>, vector<128x128xbf16>, vector<8x128xf32> -> vector<8x128xf32>
    %18 = arith.addf %15, %17 : vector<8x128xf32>
    %19 = math.tanh %18 : vector<8x128xf32>
    %20 = arith.index_cast %c0_i32_14 : i32 to index
    %c0_18 = arith.constant 0 : index
    %c0_19 = arith.constant 0 : index
    %21 = vector.load %arg8[%20, %c0_18, %c0_19] : memref<8x8x128xf32, #tpu.memory_space<vmem>>, vector<1x8x128xf32>
    %22 = vector.shape_cast %21 : vector<1x8x128xf32> to vector<8x128xf32>
    %23 = vector.shape_cast %19 : vector<8x128xf32> to vector<1x8x128xf32>
    tpu.vector_store %arg8[%20, %c0_18, %c0_19], %23 {strides = array<i32>} : memref<8x8x128xf32, #tpu.memory_space<vmem>>, vector<1x8x128xf32>,
    %c1_i32 = arith.constant 1 : i32
    %24 = arith.index_cast %c1_i32 : i32 to index
    %c0_20 = arith.constant 0 : index
    %c0_21 = arith.constant 0 : index
    %25 = vector.load %arg8[%24, %c0_20, %c0_21] : memref<8x8x128xf32, #tpu.memory_space<vmem>>, vector<1x8x128xf32>
    %26 = vector.shape_cast %25 : vector<1x8x128xf32> to vector<8x128xf32>
    %27 = arith.truncf %19 : vector<8x128xf32> to vector<8x128xbf16>
    %cst_22 = arith.constant dense<0.000000e+00> : vector<8x128xf32>
    %28 = tpu.matmul %27, %11, %cst_22 {dimension_numbers = #tpu.dot_dimension_numbers<[1], [0], [0], [1], [0, 0, 1, 1], [], []>} : vector<8x128xbf16>, vector<128x128xbf16>, vector<8x128xf32> -> vector<8x128xf32>
    %29 = arith.addf %26, %28 : vector<8x128xf32>
    %30 = math.tanh %29 : vector<8x128xf32>
    %31 = arith.index_cast %c1_i32 : i32 to index
    %c0_23 = arith.constant 0 : index
    %c0_24 = arith.constant 0 : index
    %32 = vector.load %arg8[%31, %c0_23, %c0_24] : memref<8x8x128xf32, #tpu.memory_space<vmem>>, vector<1x8x128xf32>
    %33 = vector.shape_cast %32 : vector<1x8x128xf32> to vector<8x128xf32>
    %34 = vector.shape_cast %30 : vector<8x128xf32> to vector<1x8x128xf32>
    tpu.vector_store %arg8[%31, %c0_23, %c0_24], %34 {strides = array<i32>} : memref<8x8x128xf32, #tpu.memory_space<vmem>>, vector<1x8x128xf32>,
    %c2_i32 = arith.constant 2 : i32
    %35 = arith.index_cast %c2_i32 : i32 to index
    %c0_25 = arith.constant 0 : index
    %c0_26 = arith.constant 0 : index
    %36 = vector.load %arg8[%35, %c0_25, %c0_26] : memref<8x8x128xf32, #tpu.memory_space<vmem>>, vector<1x8x128xf32>
    %37 = vector.shape_cast %36 : vector<1x8x128xf32> to vector<8x128xf32>
    %38 = arith.truncf %30 : vector<8x128xf32> to vector<8x128xbf16>
    %cst_27 = arith.constant dense<0.000000e+00> : vector<8x128xf32>
    %39 = tpu.matmul %38, %11, %cst_27 {dimension_numbers = #tpu.dot_dimension_numbers<[1], [0], [0], [1], [0, 0, 1, 1], [], []>} : vector<8x128xbf16>, vector<128x128xbf16>, vector<8x128xf32> -> vector<8x128xf32>
    %40 = arith.addf %37, %39 : vector<8x128xf32>
    %41 = math.tanh %40 : vector<8x128xf32>
    %42 = arith.index_cast %c2_i32 : i32 to index
    %c0_28 = arith.constant 0 : index
    %c0_29 = arith.constant 0 : index
    %43 = vector.load %arg8[%42, %c0_28, %c0_29] : memref<8x8x128xf32, #tpu.memory_space<vmem>>, vector<1x8x128xf32>
    %44 = vector.shape_cast %43 : vector<1x8x128xf32> to vector<8x128xf32>
    %45 = vector.shape_cast %41 : vector<8x128xf32> to vector<1x8x128xf32>
    tpu.vector_store %arg8[%42, %c0_28, %c0_29], %45 {strides = array<i32>} : memref<8x8x128xf32, #tpu.memory_space<vmem>>, vector<1x8x128xf32>,
    %c3_i32 = arith.constant 3 : i32
    %46 = arith.index_cast %c3_i32 : i32 to index
    %c0_30 = arith.constant 0 : index
    %c0_31 = arith.constant 0 : index
    %47 = vector.load %arg8[%46, %c0_30, %c0_31] : memref<8x8x128xf32, #tpu.memory_space<vmem>>, vector<1x8x128xf32>
    %48 = vector.shape_cast %47 : vector<1x8x128xf32> to vector<8x128xf32>
    %49 = arith.truncf %41 : vector<8x128xf32> to vector<8x128xbf16>
    %cst_32 = arith.constant dense<0.000000e+00> : vector<8x128xf32>
    %50 = tpu.matmul %49, %11, %cst_32 {dimension_numbers = #tpu.dot_dimension_numbers<[1], [0], [0], [1], [0, 0, 1, 1], [], []>} : vector<8x128xbf16>, vector<128x128xbf16>, vector<8x128xf32> -> vector<8x128xf32>
    %51 = arith.addf %48, %50 : vector<8x128xf32>
    %52 = math.tanh %51 : vector<8x128xf32>
    %53 = arith.index_cast %c3_i32 : i32 to index
    %c0_33 = arith.constant 0 : index
    %c0_34 = arith.constant 0 : index
    %54 = vector.load %arg8[%53, %c0_33, %c0_34] : memref<8x8x128xf32, #tpu.memory_space<vmem>>, vector<1x8x128xf32>
    %55 = vector.shape_cast %54 : vector<1x8x128xf32> to vector<8x128xf32>
    %56 = vector.shape_cast %52 : vector<8x128xf32> to vector<1x8x128xf32>
    tpu.vector_store %arg8[%53, %c0_33, %c0_34], %56 {strides = array<i32>} : memref<8x8x128xf32, #tpu.memory_space<vmem>>, vector<1x8x128xf32>,
    %c4_i32 = arith.constant 4 : i32
    %57 = arith.index_cast %c4_i32 : i32 to index
    %c0_35 = arith.constant 0 : index
    %c0_36 = arith.constant 0 : index
    %58 = vector.load %arg8[%57, %c0_35, %c0_36] : memref<8x8x128xf32, #tpu.memory_space<vmem>>, vector<1x8x128xf32>
    %59 = vector.shape_cast %58 : vector<1x8x128xf32> to vector<8x128xf32>
    %60 = arith.truncf %52 : vector<8x128xf32> to vector<8x128xbf16>
    %cst_37 = arith.constant dense<0.000000e+00> : vector<8x128xf32>
    %61 = tpu.matmul %60, %11, %cst_37 {dimension_numbers = #tpu.dot_dimension_numbers<[1], [0], [0], [1], [0, 0, 1, 1], [], []>} : vector<8x128xbf16>, vector<128x128xbf16>, vector<8x128xf32> -> vector<8x128xf32>
    %62 = arith.addf %59, %61 : vector<8x128xf32>
    %63 = math.tanh %62 : vector<8x128xf32>
    %64 = arith.index_cast %c4_i32 : i32 to index
    %c0_38 = arith.constant 0 : index
    %c0_39 = arith.constant 0 : index
    %65 = vector.load %arg8[%64, %c0_38, %c0_39] : memref<8x8x128xf32, #tpu.memory_space<vmem>>, vector<1x8x128xf32>
    %66 = vector.shape_cast %65 : vector<1x8x128xf32> to vector<8x128xf32>
    %67 = vector.shape_cast %63 : vector<8x128xf32> to vector<1x8x128xf32>
    tpu.vector_store %arg8[%64, %c0_38, %c0_39], %67 {strides = array<i32>} : memref<8x8x128xf32, #tpu.memory_space<vmem>>, vector<1x8x128xf32>,
    %c5_i32 = arith.constant 5 : i32
    %68 = arith.index_cast %c5_i32 : i32 to index
    %c0_40 = arith.constant 0 : index
    %c0_41 = arith.constant 0 : index
    %69 = vector.load %arg8[%68, %c0_40, %c0_41] : memref<8x8x128xf32, #tpu.memory_space<vmem>>, vector<1x8x128xf32>
    %70 = vector.shape_cast %69 : vector<1x8x128xf32> to vector<8x128xf32>
    %71 = arith.truncf %63 : vector<8x128xf32> to vector<8x128xbf16>
    %cst_42 = arith.constant dense<0.000000e+00> : vector<8x128xf32>
    %72 = tpu.matmul %71, %11, %cst_42 {dimension_numbers = #tpu.dot_dimension_numbers<[1], [0], [0], [1], [0, 0, 1, 1], [], []>} : vector<8x128xbf16>, vector<128x128xbf16>, vector<8x128xf32> -> vector<8x128xf32>
    %73 = arith.addf %70, %72 : vector<8x128xf32>
    %74 = math.tanh %73 : vector<8x128xf32>
    %75 = arith.index_cast %c5_i32 : i32 to index
    %c0_43 = arith.constant 0 : index
    %c0_44 = arith.constant 0 : index
    %76 = vector.load %arg8[%75, %c0_43, %c0_44] : memref<8x8x128xf32, #tpu.memory_space<vmem>>, vector<1x8x128xf32>
    %77 = vector.shape_cast %76 : vector<1x8x128xf32> to vector<8x128xf32>
    %78 = vector.shape_cast %74 : vector<8x128xf32> to vector<1x8x128xf32>
    tpu.vector_store %arg8[%75, %c0_43, %c0_44], %78 {strides = array<i32>} : memref<8x8x128xf32, #tpu.memory_space<vmem>>, vector<1x8x128xf32>,
    %c6_i32 = arith.constant 6 : i32
    %79 = arith.index_cast %c6_i32 : i32 to index
    %c0_45 = arith.constant 0 : index
    %c0_46 = arith.constant 0 : index
    %80 = vector.load %arg8[%79, %c0_45, %c0_46] : memref<8x8x128xf32, #tpu.memory_space<vmem>>, vector<1x8x128xf32>
    %81 = vector.shape_cast %80 : vector<1x8x128xf32> to vector<8x128xf32>
    %82 = arith.truncf %74 : vector<8x128xf32> to vector<8x128xbf16>
    %cst_47 = arith.constant dense<0.000000e+00> : vector<8x128xf32>
    %83 = tpu.matmul %82, %11, %cst_47 {dimension_numbers = #tpu.dot_dimension_numbers<[1], [0], [0], [1], [0, 0, 1, 1], [], []>} : vector<8x128xbf16>, vector<128x128xbf16>, vector<8x128xf32> -> vector<8x128xf32>
    %84 = arith.addf %81, %83 : vector<8x128xf32>
    %85 = math.tanh %84 : vector<8x128xf32>
    %86 = arith.index_cast %c6_i32 : i32 to index
    %c0_48 = arith.constant 0 : index
    %c0_49 = arith.constant 0 : index
    %87 = vector.load %arg8[%86, %c0_48, %c0_49] : memref<8x8x128xf32, #tpu.memory_space<vmem>>, vector<1x8x128xf32>
    %88 = vector.shape_cast %87 : vector<1x8x128xf32> to vector<8x128xf32>
    %89 = vector.shape_cast %85 : vector<8x128xf32> to vector<1x8x128xf32>
    tpu.vector_store %arg8[%86, %c0_48, %c0_49], %89 {strides = array<i32>} : memref<8x8x128xf32, #tpu.memory_space<vmem>>, vector<1x8x128xf32>,
    %c7_i32 = arith.constant 7 : i32
    %90 = arith.index_cast %c7_i32 : i32 to index
    %c0_50 = arith.constant 0 : index
    %c0_51 = arith.constant 0 : index
    %91 = vector.load %arg8[%90, %c0_50, %c0_51] : memref<8x8x128xf32, #tpu.memory_space<vmem>>, vector<1x8x128xf32>
    %92 = vector.shape_cast %91 : vector<1x8x128xf32> to vector<8x128xf32>
    %93 = arith.truncf %85 : vector<8x128xf32> to vector<8x128xbf16>
    %cst_52 = arith.constant dense<0.000000e+00> : vector<8x128xf32>
    %94 = tpu.matmul %93, %11, %cst_52 {dimension_numbers = #tpu.dot_dimension_numbers<[1], [0], [0], [1], [0, 0, 1, 1], [], []>} : vector<8x128xbf16>, vector<128x128xbf16>, vector<8x128xf32> -> vector<8x128xf32>
    %95 = arith.addf %92, %94 : vector<8x128xf32>
    %96 = math.tanh %95 : vector<8x128xf32>
    %97 = arith.index_cast %c7_i32 : i32 to index
    %c0_53 = arith.constant 0 : index
    %c0_54 = arith.constant 0 : index
    %98 = vector.load %arg8[%97, %c0_53, %c0_54] : memref<8x8x128xf32, #tpu.memory_space<vmem>>, vector<1x8x128xf32>
    %99 = vector.shape_cast %98 : vector<1x8x128xf32> to vector<8x128xf32>
    %100 = vector.shape_cast %96 : vector<8x128xf32> to vector<1x8x128xf32>
    tpu.vector_store %arg8[%97, %c0_53, %c0_54], %100 {strides = array<i32>} : memref<8x8x128xf32, #tpu.memory_space<vmem>>, vector<1x8x128xf32>,
    %c8_i32 = arith.constant 8 : i32
    %c0_55 = arith.constant 0 : index
    %c0_56 = arith.constant 0 : index
    %101 = vector.load %arg10[%c0_55, %c0_56] : memref<8x128xf32, #tpu.memory_space<vmem>>, vector<8x128xf32>
    tpu.vector_store %arg10[%c0_55, %c0_56], %96 {strides = array<i32>} : memref<8x128xf32, #tpu.memory_space<vmem>>, vector<8x128xf32>,
    %c0_57 = arith.constant 0 : index
    %c0_58 = arith.constant 0 : index
    %c0_59 = arith.constant 0 : index
    %102 = vector.load %arg8[%c0_57, %c0_58, %c0_59] : memref<8x8x128xf32, #tpu.memory_space<vmem>>, vector<8x8x128xf32>
    %c0_60 = arith.constant 0 : index
    %c0_61 = arith.constant 0 : index
    %103 = vector.load %arg6[%c0_60, %c0_61] : memref<128x128xf32, #tpu.memory_space<vmem>>, vector<128x128xf32>
    "tpu.trace_start"() <{level = 10 : i32, message = "tbh,ho->tbo"}> : () -> ()
    %cst_62 = arith.constant dense<0.000000e+00> : vector<8x8x128xf32>
    %104 = tpu.matmul %102, %103, %cst_62 {dimension_numbers = #tpu.dot_dimension_numbers<[2], [0], [0, 1], [1], [0, 0, 0, 1, 1, 1], [], []>} : vector<8x8x128xf32>, vector<128x128xf32>, vector<8x8x128xf32> -> vector<8x8x128xf32>
    "tpu.trace_stop"() : () -> ()
    %c0_63 = arith.constant 0 : index
    %c0_64 = arith.constant 0 : index
    %105 = vector.load %arg7[%c0_63, %c0_64] : memref<1x128xf32, #tpu.memory_space<vmem>>, vector<1x128xf32>
    %106 = vector.shape_cast %105 : vector<1x128xf32> to vector<1x1x128xf32>
    %107 = vector.broadcast %106 : vector<1x1x128xf32> to vector<8x8x128xf32>
    %108 = arith.addf %104, %107 : vector<8x8x128xf32>
    %c0_65 = arith.constant 0 : index
    %c0_66 = arith.constant 0 : index
    %c0_67 = arith.constant 0 : index
    %109 = vector.load %arg9[%c0_65, %c0_66, %c0_67] : memref<8x8x128xf32, #tpu.memory_space<vmem>>, vector<8x8x128xf32>
    tpu.vector_store %arg9[%c0_65, %c0_66, %c0_67], %108 {strides = array<i32>} : memref<8x8x128xf32, #tpu.memory_space<vmem>>, vector<8x8x128xf32>,
    return
  }
  func.func @transform_0(%arg0: i32, %arg1: i32) -> (i32, i32, i32) {
    %c0_i32 = arith.constant 0 : i32
    %c0_i32_0 = arith.constant 0 : i32
    return %arg1, %arg0, %c0_i32 : i32, i32, i32
  }
  func.func @transform_1(%arg0: i32, %arg1: i32) -> (i32, i32) {
    %c0_i32 = arith.constant 0 : i32
    %c0_i32_0 = arith.constant 0 : i32
    %c0_i32_1 = arith.constant 0 : i32
    return %c0_i32, %c0_i32_0 : i32, i32
  }
  func.func @transform_2(%arg0: i32, %arg1: i32) -> (i32, i32) {
    %c0_i32 = arith.constant 0 : i32
    %c0_i32_0 = arith.constant 0 : i32
    %c0_i32_1 = arith.constant 0 : i32
    return %c0_i32, %c0_i32_0 : i32, i32
  }
  func.func @transform_3(%arg0: i32, %arg1: i32) -> (i32, i32) {
    %c0_i32 = arith.constant 0 : i32
    %c0_i32_0 = arith.constant 0 : i32
    %c0_i32_1 = arith.constant 0 : i32
    return %c0_i32, %c0_i32_0 : i32, i32
  }
  func.func @transform_4(%arg0: i32, %arg1: i32) -> (i32, i32) {
    %c0_i32 = arith.constant 0 : i32
    %c0_i32_0 = arith.constant 0 : i32
    %c0_i32_1 = arith.constant 0 : i32
    return %c0_i32, %c0_i32_0 : i32, i32
  }
  func.func @transform_5(%arg0: i32, %arg1: i32) -> (i32, i32) {
    %c0_i32 = arith.constant 0 : i32
    %c0_i32_0 = arith.constant 0 : i32
    %c0_i32_1 = arith.constant 0 : i32
    return %c0_i32, %c0_i32_0 : i32, i32
  }
  func.func @transform_6(%arg0: i32, %arg1: i32) -> (i32, i32, i32) {
    %c0_i32 = arith.constant 0 : i32
    %c0_i32_0 = arith.constant 0 : i32
    return %arg1, %arg0, %c0_i32 : i32, i32, i32
  }
  func.func @transform_7(%arg0: i32, %arg1: i32) -> (i32, i32, i32) {
    %c0_i32 = arith.constant 0 : i32
    %c0_i32_0 = arith.constant 0 : i32
    return %arg1, %arg0, %c0_i32 : i32, i32, i32
  }
}

module attributes {stable_mosaic.version = 11 : i64} {
  func.func @kernel(%arg0: i32, %arg1: i32, %arg2: memref<8x8x16xf32, #tpu.memory_space<vmem>>, %arg3: memref<16x128xf32, #tpu.memory_space<vmem>>, %arg4: memref<1x128xf32, #tpu.memory_space<vmem>>, %arg5: memref<128x128xbf16, #tpu.memory_space<vmem>>, %arg6: memref<128x128xf32, #tpu.memory_space<vmem>>, %arg7: memref<1x128xf32, #tpu.memory_space<vmem>>, %arg8: memref<8x8x128xf32, #tpu.memory_space<vmem>>, %arg9: memref<8x8x128xf32, #tpu.memory_space<vmem>>, %arg10: memref<8x128xf32, #tpu.memory_space<vmem>>) attributes {dimension_semantics = [#tpu.dimension_semantics<parallel>, #tpu.dimension_semantics<arbitrary>], iteration_bounds = array<i64: 1, 1>, scalar_prefetch = 0 : i64, scratch_operands = 1 : i64, tpu.core_type = #tpu.core_type<tc>, window_params = [{transform_indices = @transform_0, window_bounds = array<i64: 8, 8, 16>}, {pipeline_mode = #tpu.pipeline_mode<synchronous>, transform_indices = @transform_1, window_bounds = array<i64: 16, 128>}, {pipeline_mode = #tpu.pipeline_mode<synchronous>, transform_indices = @transform_2, window_bounds = array<i64: 1, 128>}, {pipeline_mode = #tpu.pipeline_mode<synchronous>, transform_indices = @transform_3, window_bounds = array<i64: 128, 128>}, {pipeline_mode = #tpu.pipeline_mode<synchronous>, transform_indices = @transform_4, window_bounds = array<i64: 128, 128>}, {pipeline_mode = #tpu.pipeline_mode<synchronous>, transform_indices = @transform_5, window_bounds = array<i64: 1, 128>}, {transform_indices = @transform_6, window_bounds = array<i64: 8, 8, 128>}, {transform_indices = @transform_7, window_bounds = array<i64: 8, 8, 128>}]} {
    %c0_i32 = arith.constant 0 : i32
    %0 = arith.cmpi eq, %arg1, %c0_i32 : i32
    %1 = arith.extui %0 : i1 to i32
    %c0_i32_0 = arith.constant 0 : i32
    %2 = arith.cmpi ne, %1, %c0_i32_0 : i32
    scf.if %2 {
      %cst_68 = arith.constant 0.000000e+00 : f32
      %110 = vector.broadcast %cst_68 : f32 to vector<8x128xf32>
      %c0_69 = arith.constant 0 : index
      %c0_70 = arith.constant 0 : index
      %111 = vector.load %arg10[%c0_69, %c0_70] : memref<8x128xf32, #tpu.memory_space<vmem>>, vector<8x128xf32>
      tpu.vector_store %arg10[%c0_69, %c0_70], %110 {strides = array<i32>} : memref<8x128xf32, #tpu.memory_space<vmem>>, vector<8x128xf32>,
    } else {
    }
    %c0 = arith.constant 0 : index
    %c0_1 = arith.constant 0 : index
    %c0_2 = arith.constant 0 : index
    %3 = vector.load %arg2[%c0, %c0_1, %c0_2] : memref<8x8x16xf32, #tpu.memory_space<vmem>>, vector<8x8x16xf32>
    %c0_3 = arith.constant 0 : index
    %c0_4 = arith.constant 0 : index
    %4 = vector.load %arg3[%c0_3, %c0_4] : memref<16x128xf32, #tpu.memory_space<vmem>>, vector<16x128xf32>
    "tpu.trace_start"() <{level = 10 : i32, message = "tbi,ih->tbh"}> : () -> ()
    %cst = arith.constant dense<0.000000e+00> : vector<8x8x128xf32>
    %5 = tpu.matmul %3, %4, %cst {dimension_numbers = #tpu.dot_dimension_numbers<[2], [0], [0, 1], [1], [0, 0, 0, 1, 1, 1], [], []>} : vector<8x8x16xf32>, vector<16x128xf32>, vector<8x8x128xf32> -> vector<8x8x128xf32>
    "tpu.trace_stop"() : () -> ()
    %c0_5 = arith.constant 0 : index
    %c0_6 = arith.constant 0 : index
    %6 = vector.load %arg4[%c0_5, %c0_6] : memref<1x128xf32, #tpu.memory_space<vmem>>, vector<1x128xf32>
    %7 = vector.shape_cast %6 : vector<1x128xf32> to vector<1x1x128xf32>
    %8 = vector.broadcast %7 : vector<1x1x128xf32> to vector<8x8x128xf32>
    %9 = arith.addf %5, %8 : vector<8x8x128xf32>
    %c0_7 = arith.constant 0 : index
    %c0_8 = arith.constant 0 : index
    %c0_9 = arith.constant 0 : index
    %10 = vector.load %arg8[%c0_7, %c0_8, %c0_9] : memref<8x8x128xf32, #tpu.memory_space<vmem>>, vector<8x8x128xf32>
    tpu.vector_store %arg8[%c0_7, %c0_8, %c0_9], %9 {strides = array<i32>} : memref<8x8x128xf32, #tpu.memory_space<vmem>>, vector<8x8x128xf32>,
    %c0_10 = arith.constant 0 : index
    %c0_11 = arith.constant 0 : index
    %11 = vector.load %arg5[%c0_10, %c0_11] : memref<128x128xbf16, #tpu.memory_space<vmem>>, vector<128x128xbf16>
    %c0_12 = arith.constant 0 : index
    %c0_13 = arith.constant 0 : index
    %12 = vector.load %arg10[%c0_12, %c0_13] : memref<8x128xf32, #tpu.memory_space<vmem>>, vector<8x128xf32>
    %c0_i32_14 = arith.constant 0 : i32
    %13 = arith.index_cast %c0_i32_14 : i32 to index
    %c0_15 = arith.constant 0 : index
    %c0_16 = arith.constant 0 : index
    %14 = vector.load %arg8[%13, %c0_15, %c0_16] : memref<8x8x128xf32, #tpu.memory_space<vmem>>, vector<1x8x128xf32>
    %15 = vector.shape_cast %14 : vector<1x8x128xf32> to vector<8x128xf32>
    %16 = arith.truncf %12 : vector<8x128xf32> to vector<8x128xbf16>
    %cst_17 = arith.constant dense<0.000000e+00> : vector<8x128xf32>
    %17 = tpu.matmul %16, %11, %cst_17 {dimension_numbers = #tpu.dot_dimension_numbers<[1], [0], [0], [1], [0, 0, 1, 1], [], []>} : vector<8x128xbf16>, vector<128x128xbf16>, vector<8x128xf32> -> vector<8x128xf32>
    %18 = arith.addf %15, %17 : vector<8x128xf32>
    %19 = math.tanh %18 : vector<8x128xf32>
    %20 = arith.index_cast %c0_i32_14 : i32 to index
    %c0_18 = arith.constant 0 : index
    %c0_19 = arith.constant 0 : index
    %21 = vector.load %arg8[%20, %c0_18, %c0_19] : memref<8x8x128xf32, #tpu.memory_space<vmem>>, vector<1x8x128xf32>
    %22 = vector.shape_cast %21 : vector<1x8x128xf32> to vector<8x128xf32>
    %23 = vector.shape_cast %19 : vector<8x128xf32> to vector<1x8x128xf32>
    tpu.vector_store %arg8[%20, %c0_18, %c0_19], %23 {strides = array<i32>} : memref<8x8x128xf32, #tpu.memory_space<vmem>>, vector<1x8x128xf32>,
    %c1_i32 = arith.constant 1 : i32
    %24 = arith.index_cast %c1_i32 : i32 to index
    %c0_20 = arith.constant 0 : index
    %c0_21 = arith.constant 0 : index
    %25 = vector.load %arg8[%24, %c0_20, %c0_21] : memref<8x8x128xf32, #tpu.memory_space<vmem>>, vector<1x8x128xf32>
    %26 = vector.shape_cast %25 : vector<1x8x128xf32> to vector<8x128xf32>
    %27 = arith.truncf %19 : vector<8x128xf32> to vector<8x128xbf16>
    %cst_22 = arith.constant dense<0.000000e+00> : vector<8x128xf32>
    %28 = tpu.matmul %27, %11, %cst_22 {dimension_numbers = #tpu.dot_dimension_numbers<[1], [0], [0], [1], [0, 0, 1, 1], [], []>} : vector<8x128xbf16>, vector<128x128xbf16>, vector<8x128xf32> -> vector<8x128xf32>
    %29 = arith.addf %26, %28 : vector<8x128xf32>
    %30 = math.tanh %29 : vector<8x128xf32>
    %31 = arith.index_cast %c1_i32 : i32 to index
    %c0_23 = arith.constant 0 : index
    %c0_24 = arith.constant 0 : index
    %32 = vector.load %arg8[%31, %c0_23, %c0_24] : memref<8x8x128xf32, #tpu.memory_space<vmem>>, vector<1x8x128xf32>
    %33 = vector.shape_cast %32 : vector<1x8x128xf32> to vector<8x128xf32>
    %34 = vector.shape_cast %30 : vector<8x128xf32> to vector<1x8x128xf32>
    tpu.vector_store %arg8[%31, %c0_23, %c0_24], %34 {strides = array<i32>} : memref<8x8x128xf32, #tpu.memory_space<vmem>>, vector<1x8x128xf32>,
    %c2_i32 = arith.constant 2 : i32
    %35 = arith.index_cast %c2_i32 : i32 to index
    %c0_25 = arith.constant 0 : index
    %c0_26 = arith.constant 0 : index
    %36 = vector.load %arg8[%35, %c0_25, %c0_26] : memref<8x8x128xf32, #tpu.memory_space<vmem>>, vector<1x8x128xf32>
    %37 = vector.shape_cast %36 : vector<1x8x128xf32> to vector<8x128xf32>
    %38 = arith.truncf %30 : vector<8x128xf32> to vector<8x128xbf16>
    %cst_27 = arith.constant dense<0.000000e+00> : vector<8x128xf32>
    %39 = tpu.matmul %38, %11, %cst_27 {dimension_numbers = #tpu.dot_dimension_numbers<[1], [0], [0], [1], [0, 0, 1, 1], [], []>} : vector<8x128xbf16>, vector<128x128xbf16>, vector<8x128xf32> -> vector<8x128xf32>
    %40 = arith.addf %37, %39 : vector<8x128xf32>
    %41 = math.tanh %40 : vector<8x128xf32>
    %42 = arith.index_cast %c2_i32 : i32 to index
    %c0_28 = arith.constant 0 : index
    %c0_29 = arith.constant 0 : index
    %43 = vector.load %arg8[%42, %c0_28, %c0_29] : memref<8x8x128xf32, #tpu.memory_space<vmem>>, vector<1x8x128xf32>
    %44 = vector.shape_cast %43 : vector<1x8x128xf32> to vector<8x128xf32>
    %45 = vector.shape_cast %41 : vector<8x128xf32> to vector<1x8x128xf32>
    tpu.vector_store %arg8[%42, %c0_28, %c0_29], %45 {strides = array<i32>} : memref<8x8x128xf32, #tpu.memory_space<vmem>>, vector<1x8x128xf32>,
    %c3_i32 = arith.constant 3 : i32
    %46 = arith.index_cast %c3_i32 : i32 to index
    %c0_30 = arith.constant 0 : index
    %c0_31 = arith.constant 0 : index
    %47 = vector.load %arg8[%46, %c0_30, %c0_31] : memref<8x8x128xf32, #tpu.memory_space<vmem>>, vector<1x8x128xf32>
    %48 = vector.shape_cast %47 : vector<1x8x128xf32> to vector<8x128xf32>
    %49 = arith.truncf %41 : vector<8x128xf32> to vector<8x128xbf16>
    %cst_32 = arith.constant dense<0.000000e+00> : vector<8x128xf32>
    %50 = tpu.matmul %49, %11, %cst_32 {dimension_numbers = #tpu.dot_dimension_numbers<[1], [0], [0], [1], [0, 0, 1, 1], [], []>} : vector<8x128xbf16>, vector<128x128xbf16>, vector<8x128xf32> -> vector<8x128xf32>
    %51 = arith.addf %48, %50 : vector<8x128xf32>
    %52 = math.tanh %51 : vector<8x128xf32>
    %53 = arith.index_cast %c3_i32 : i32 to index
    %c0_33 = arith.constant 0 : index
    %c0_34 = arith.constant 0 : index
    %54 = vector.load %arg8[%53, %c0_33, %c0_34] : memref<8x8x128xf32, #tpu.memory_space<vmem>>, vector<1x8x128xf32>
    %55 = vector.shape_cast %54 : vector<1x8x128xf32> to vector<8x128xf32>
    %56 = vector.shape_cast %52 : vector<8x128xf32> to vector<1x8x128xf32>
    tpu.vector_store %arg8[%53, %c0_33, %c0_34], %56 {strides = array<i32>} : memref<8x8x128xf32, #tpu.memory_space<vmem>>, vector<1x8x128xf32>,
    %c4_i32 = arith.constant 4 : i32
    %57 = arith.index_cast %c4_i32 : i32 to index
    %c0_35 = arith.constant 0 : index
    %c0_36 = arith.constant 0 : index
    %58 = vector.load %arg8[%57, %c0_35, %c0_36] : memref<8x8x128xf32, #tpu.memory_space<vmem>>, vector<1x8x128xf32>
    %59 = vector.shape_cast %58 : vector<1x8x128xf32> to vector<8x128xf32>
    %60 = arith.truncf %52 : vector<8x128xf32> to vector<8x128xbf16>
    %cst_37 = arith.constant dense<0.000000e+00> : vector<8x128xf32>
    %61 = tpu.matmul %60, %11, %cst_37 {dimension_numbers = #tpu.dot_dimension_numbers<[1], [0], [0], [1], [0, 0, 1, 1], [], []>} : vector<8x128xbf16>, vector<128x128xbf16>, vector<8x128xf32> -> vector<8x128xf32>
    %62 = arith.addf %59, %61 : vector<8x128xf32>
    %63 = math.tanh %62 : vector<8x128xf32>
    %64 = arith.index_cast %c4_i32 : i32 to index
    %c0_38 = arith.constant 0 : index
    %c0_39 = arith.constant 0 : index
    %65 = vector.load %arg8[%64, %c0_38, %c0_39] : memref<8x8x128xf32, #tpu.memory_space<vmem>>, vector<1x8x128xf32>
    %66 = vector.shape_cast %65 : vector<1x8x128xf32> to vector<8x128xf32>
    %67 = vector.shape_cast %63 : vector<8x128xf32> to vector<1x8x128xf32>
    tpu.vector_store %arg8[%64, %c0_38, %c0_39], %67 {strides = array<i32>} : memref<8x8x128xf32, #tpu.memory_space<vmem>>, vector<1x8x128xf32>,
    %c5_i32 = arith.constant 5 : i32
    %68 = arith.index_cast %c5_i32 : i32 to index
    %c0_40 = arith.constant 0 : index
    %c0_41 = arith.constant 0 : index
    %69 = vector.load %arg8[%68, %c0_40, %c0_41] : memref<8x8x128xf32, #tpu.memory_space<vmem>>, vector<1x8x128xf32>
    %70 = vector.shape_cast %69 : vector<1x8x128xf32> to vector<8x128xf32>
    %71 = arith.truncf %63 : vector<8x128xf32> to vector<8x128xbf16>
    %cst_42 = arith.constant dense<0.000000e+00> : vector<8x128xf32>
    %72 = tpu.matmul %71, %11, %cst_42 {dimension_numbers = #tpu.dot_dimension_numbers<[1], [0], [0], [1], [0, 0, 1, 1], [], []>} : vector<8x128xbf16>, vector<128x128xbf16>, vector<8x128xf32> -> vector<8x128xf32>
    %73 = arith.addf %70, %72 : vector<8x128xf32>
    %74 = math.tanh %73 : vector<8x128xf32>
    %75 = arith.index_cast %c5_i32 : i32 to index
    %c0_43 = arith.constant 0 : index
    %c0_44 = arith.constant 0 : index
    %76 = vector.load %arg8[%75, %c0_43, %c0_44] : memref<8x8x128xf32, #tpu.memory_space<vmem>>, vector<1x8x128xf32>
    %77 = vector.shape_cast %76 : vector<1x8x128xf32> to vector<8x128xf32>
    %78 = vector.shape_cast %74 : vector<8x128xf32> to vector<1x8x128xf32>
    tpu.vector_store %arg8[%75, %c0_43, %c0_44], %78 {strides = array<i32>} : memref<8x8x128xf32, #tpu.memory_space<vmem>>, vector<1x8x128xf32>,
    %c6_i32 = arith.constant 6 : i32
    %79 = arith.index_cast %c6_i32 : i32 to index
    %c0_45 = arith.constant 0 : index
    %c0_46 = arith.constant 0 : index
    %80 = vector.load %arg8[%79, %c0_45, %c0_46] : memref<8x8x128xf32, #tpu.memory_space<vmem>>, vector<1x8x128xf32>
    %81 = vector.shape_cast %80 : vector<1x8x128xf32> to vector<8x128xf32>
    %82 = arith.truncf %74 : vector<8x128xf32> to vector<8x128xbf16>
    %cst_47 = arith.constant dense<0.000000e+00> : vector<8x128xf32>
    %83 = tpu.matmul %82, %11, %cst_47 {dimension_numbers = #tpu.dot_dimension_numbers<[1], [0], [0], [1], [0, 0, 1, 1], [], []>} : vector<8x128xbf16>, vector<128x128xbf16>, vector<8x128xf32> -> vector<8x128xf32>
    %84 = arith.addf %81, %83 : vector<8x128xf32>
    %85 = math.tanh %84 : vector<8x128xf32>
    %86 = arith.index_cast %c6_i32 : i32 to index
    %c0_48 = arith.constant 0 : index
    %c0_49 = arith.constant 0 : index
    %87 = vector.load %arg8[%86, %c0_48, %c0_49] : memref<8x8x128xf32, #tpu.memory_space<vmem>>, vector<1x8x128xf32>
    %88 = vector.shape_cast %87 : vector<1x8x128xf32> to vector<8x128xf32>
    %89 = vector.shape_cast %85 : vector<8x128xf32> to vector<1x8x128xf32>
    tpu.vector_store %arg8[%86, %c0_48, %c0_49], %89 {strides = array<i32>} : memref<8x8x128xf32, #tpu.memory_space<vmem>>, vector<1x8x128xf32>,
    %c7_i32 = arith.constant 7 : i32
    %90 = arith.index_cast %c7_i32 : i32 to index
    %c0_50 = arith.constant 0 : index
    %c0_51 = arith.constant 0 : index
    %91 = vector.load %arg8[%90, %c0_50, %c0_51] : memref<8x8x128xf32, #tpu.memory_space<vmem>>, vector<1x8x128xf32>
    %92 = vector.shape_cast %91 : vector<1x8x128xf32> to vector<8x128xf32>
    %93 = arith.truncf %85 : vector<8x128xf32> to vector<8x128xbf16>
    %cst_52 = arith.constant dense<0.000000e+00> : vector<8x128xf32>
    %94 = tpu.matmul %93, %11, %cst_52 {dimension_numbers = #tpu.dot_dimension_numbers<[1], [0], [0], [1], [0, 0, 1, 1], [], []>} : vector<8x128xbf16>, vector<128x128xbf16>, vector<8x128xf32> -> vector<8x128xf32>
    %95 = arith.addf %92, %94 : vector<8x128xf32>
    %96 = math.tanh %95 : vector<8x128xf32>
    %97 = arith.index_cast %c7_i32 : i32 to index
    %c0_53 = arith.constant 0 : index
    %c0_54 = arith.constant 0 : index
    %98 = vector.load %arg8[%97, %c0_53, %c0_54] : memref<8x8x128xf32, #tpu.memory_space<vmem>>, vector<1x8x128xf32>
    %99 = vector.shape_cast %98 : vector<1x8x128xf32> to vector<8x128xf32>
    %100 = vector.shape_cast %96 : vector<8x128xf32> to vector<1x8x128xf32>
    tpu.vector_store %arg8[%97, %c0_53, %c0_54], %100 {strides = array<i32>} : memref<8x8x128xf32, #tpu.memory_space<vmem>>, vector<1x8x128xf32>,
    %c8_i32 = arith.constant 8 : i32
    %c0_55 = arith.constant 0 : index
    %c0_56 = arith.constant 0 : index
    %101 = vector.load %arg10[%c0_55, %c0_56] : memref<8x128xf32, #tpu.memory_space<vmem>>, vector<8x128xf32>
    tpu.vector_store %arg10[%c0_55, %c0_56], %96 {strides = array<i32>} : memref<8x128xf32, #tpu.memory_space<vmem>>, vector<8x128xf32>,
    %c0_57 = arith.constant 0 : index
    %c0_58 = arith.constant 0 : index
    %c0_59 = arith.constant 0 : index
    %102 = vector.load %arg8[%c0_57, %c0_58, %c0_59] : memref<8x8x128xf32, #tpu.memory_space<vmem>>, vector<8x8x128xf32>
    %c0_60 = arith.constant 0 : index
    %c0_61 = arith.constant 0 : index
    %103 = vector.load %arg6[%c0_60, %c0_61] : memref<128x128xf32, #tpu.memory_space<vmem>>, vector<128x128xf32>
    "tpu.trace_start"() <{level = 10 : i32, message = "tbh,ho->tbo"}> : () -> ()
    %cst_62 = arith.constant dense<0.000000e+00> : vector<8x8x128xf32>
    %104 = tpu.matmul %102, %103, %cst_62 {dimension_numbers = #tpu.dot_dimension_numbers<[2], [0], [0, 1], [1], [0, 0, 0, 1, 1, 1], [], []>} : vector<8x8x128xf32>, vector<128x128xf32>, vector<8x8x128xf32> -> vector<8x8x128xf32>
    "tpu.trace_stop"() : () -> ()
    %c0_63 = arith.constant 0 : index
    %c0_64 = arith.constant 0 : index
    %105 = vector.load %arg7[%c0_63, %c0_64] : memref<1x128xf32, #tpu.memory_space<vmem>>, vector<1x128xf32>
    %106 = vector.shape_cast %105 : vector<1x128xf32> to vector<1x1x128xf32>
    %107 = vector.broadcast %106 : vector<1x1x128xf32> to vector<8x8x128xf32>
    %108 = arith.addf %104, %107 : vector<8x8x128xf32>
    %c0_65 = arith.constant 0 : index
    %c0_66 = arith.constant 0 : index
    %c0_67 = arith.constant 0 : index
    %109 = vector.load %arg9[%c0_65, %c0_66, %c0_67] : memref<8x8x128xf32, #tpu.memory_space<vmem>>, vector<8x8x128xf32>
    tpu.vector_store %arg9[%c0_65, %c0_66, %c0_67], %108 {strides = array<i32>} : memref<8x8x128xf32, #tpu.memory_space<vmem>>, vector<8x8x128xf32>,
    return
  }
  func.func @transform_0(%arg0: i32, %arg1: i32) -> (i32, i32, i32) {
    %c0_i32 = arith.constant 0 : i32
    %c0_i32_0 = arith.constant 0 : i32
    return %arg1, %arg0, %c0_i32 : i32, i32, i32
  }
  func.func @transform_1(%arg0: i32, %arg1: i32) -> (i32, i32) {
    %c0_i32 = arith.constant 0 : i32
    %c0_i32_0 = arith.constant 0 : i32
    %c0_i32_1 = arith.constant 0 : i32
    return %c0_i32, %c0_i32_0 : i32, i32
  }
  func.func @transform_2(%arg0: i32, %arg1: i32) -> (i32, i32) {
    %c0_i32 = arith.constant 0 : i32
    %c0_i32_0 = arith.constant 0 : i32
    %c0_i32_1 = arith.constant 0 : i32
    return %c0_i32, %c0_i32_0 : i32, i32
  }
  func.func @transform_3(%arg0: i32, %arg1: i32) -> (i32, i32) {
    %c0_i32 = arith.constant 0 : i32
    %c0_i32_0 = arith.constant 0 : i32
    %c0_i32_1 = arith.constant 0 : i32
    return %c0_i32, %c0_i32_0 : i32, i32
  }
  func.func @transform_4(%arg0: i32, %arg1: i32) -> (i32, i32) {
    %c0_i32 = arith.constant 0 : i32
    %c0_i32_0 = arith.constant 0 : i32
    %c0_i32_1 = arith.constant 0 : i32
    return %c0_i32, %c0_i32_0 : i32, i32
  }
  func.func @transform_5(%arg0: i32, %arg1: i32) -> (i32, i32) {
    %c0_i32 = arith.constant 0 : i32
    %c0_i32_0 = arith.constant 0 : i32
    %c0_i32_1 = arith.constant 0 : i32
    return %c0_i32, %c0_i32_0 : i32, i32
  }
  func.func @transform_6(%arg0: i32, %arg1: i32) -> (i32, i32, i32) {
    %c0_i32 = arith.constant 0 : i32
    %c0_i32_0 = arith.constant 0 : i32
    return %arg1, %arg0, %c0_i32 : i32, i32, i32
  }
  func.func @transform_7(%arg0: i32, %arg1: i32) -> (i32, i32, i32) {
    %c0_i32 = arith.constant 0 : i32
    %c0_i32_0 = arith.constant 0 : i32
    return %arg1, %arg0, %c0_i32 : i32, i32, i32
  }
}

</mosaic_0001>

<llo_original>
// kernel: tpu_custom_call.1
$region0: #{tpu_custom_call.1}
  #allocation0 [shape = 'u32[]', space=smem, size = 0x4, offset = 0x4, fixed_abs, tag = 'smem constant byte address 0x4 - core index']
  #allocation1 [shape = 'u32[144,128]{1,0:T(1,128)}', space=vmem, size = 0x12000, scoped, tag = 'internal scratch']
  #allocation2 [shape = 'f32[8,128]{1,0:T(8,128)}', space=vmem, size = 0x1000, scoped, tag = 'scratch operand']
  %s0 = inlined_call_operand.hbm [shape: f32[8,8,16], index: 0, kind: input, shape index: {}]
  %s1 = inlined_call_operand.hbm [shape: f32[16,128], index: 1, kind: input, shape index: {}]
  %s2 = inlined_call_operand.vmem [shape: f32[1,128], index: 2, kind: input, shape index: {}]
  %s3 = inlined_call_operand.hbm [shape: bf16[128,128], index: 3, kind: input, shape index: {}]
  %s4 = inlined_call_operand.hbm [shape: f32[128,128], index: 4, kind: input, shape index: {}]
  %s5 = inlined_call_operand.vmem [shape: f32[1,128], index: 5, kind: input, shape index: {}]
  %s6 = inlined_call_operand.hbm [shape: f32[8,8,128], index: 6, kind: output, shape index: {0}]
  %s7 = inlined_call_operand.hbm [shape: f32[8,8,128], index: 7, kind: output, shape index: {1}]
  %8 = xla_tuple %s6, %s7
  %s9 = sld [smem:[#allocation0]]
  $region62: #{tpu_custom_call.1} parent=0
    _
  %s11 = ssub.s32 1, %s9
  %s12 = scalar_select 0, %s11, %s9
  $region1: #{tpu_custom_call.1} parent=0
    #allocation3 [shape = 'u8[32768]{0}', space=vmem, size = 0x8000, scoped, tag = 'input window, operand 0, single buffered']
    #allocation4 [shape = 's32[1]{0}', space=sflag, size = 0x4, scoped, tag = 'scoped memory for tpu_custom_call.1']
    #allocation5 [shape = 's32[1]{0}', space=sflag, size = 0x4, scoped, tag = 'scoped memory for tpu_custom_call.1']
    #allocation6 [shape = 'u8[8192]{0}', space=vmem, size = 0x2000, scoped, tag = 'input window, operand 1, single buffered']
    #allocation7 [shape = 's32[1]{0}', space=sflag, size = 0x4, scoped, tag = 'scoped memory for tpu_custom_call.1']
    #allocation8 [shape = 'u8[32768]{0}', space=vmem, size = 0x8000, scoped, tag = 'input window, operand 3, single buffered']
    #allocation9 [shape = 'u8[65536]{0}', space=vmem, size = 0x10000, scoped, tag = 'input window, operand 4, single buffered']
    #allocation10 [shape = 's32[1]{0}', space=sflag, size = 0x4, scoped, tag = 'scoped memory for tpu_custom_call.1']
    #allocation11 [shape = 'u8[32768]{0}', space=vmem, size = 0x8000, scoped, tag = 'output window, operand 0, single buffered']
    #allocation12 [shape = 'u8[32768]{0}', space=vmem, size = 0x8000, scoped, tag = 'output window, operand 1, single buffered']
    #allocation13 [shape = 's32[1]{0}', space=sflag, size = 0x4, scoped, tag = 'scoped memory for tpu_custom_call.1']
    %13 = vsyncpa [#allocation4], 0
    %14 = vsyncpa [#allocation7], 0
    %15 = vsyncpa [#allocation10], 0
    %16 = vsyncpa [#allocation5], 0
    %17 = vsyncpa [#allocation13], 0
    // Predicated region
    $region2: #{tpu_custom_call.1} parent=1 // pred_check
      _
    $region3: #{tpu_custom_call.1} parent=1 // pred_check_branch
      %19 = sbr.rel (0) target = $region5
    $region4: #{tpu_custom_call.1} parent=1 // pred_region
      %s21 = ssub.s32 1024, 1024
      %22 = vsyncadd [#allocation4], %s21
      %s23 = sshll.u32 [#allocation3], 4
      %s24 = int_to_ptr.vmem [resolvable:$true] %s23
      %29 = dma.hbm_to_vmem [thread:$0]  %s0, 1024, %s24, [#allocation4], 128, 128, 8
    $region5: #{tpu_custom_call.1} parent=1 // pred_fallthru
      _
    // Predicated region
    $region6: #{tpu_custom_call.1} parent=1 // pred_check
      _
    $region7: #{tpu_custom_call.1} parent=1 // pred_check_branch
      %31 = sbr.rel (0) target = $region9
    $region8: #{tpu_custom_call.1} parent=1 // pred_region
      %s33 = ssub.s32 256, 256
      %34 = vsyncadd [#allocation7], %s33
      %s35 = sshll.u32 [#allocation6], 4
      %s36 = int_to_ptr.vmem [resolvable:$true] %s35
      %41 = dma.hbm_to_vmem [thread:$0]  %s1, 256, %s36, [#allocation7], 128, 128, 8
    $region9: #{tpu_custom_call.1} parent=1 // pred_fallthru
      _
    // Predicated region
    $region10: #{tpu_custom_call.1} parent=1 // pred_check
      _
    $region11: #{tpu_custom_call.1} parent=1 // pred_check_branch
      %43 = sbr.rel (0) target = $region13
    $region12: #{tpu_custom_call.1} parent=1 // pred_region
      _
    $region13: #{tpu_custom_call.1} parent=1 // pred_fallthru
      _
    // Predicated region
    $region14: #{tpu_custom_call.1} parent=1 // pred_check
      _
    $region15: #{tpu_custom_call.1} parent=1 // pred_check_branch
      %45 = sbr.rel (0) target = $region17
    $region16: #{tpu_custom_call.1} parent=1 // pred_region
      %s47 = ssub.s32 1024, 1024
      %48 = vsyncadd [#allocation7], %s47
      %s49 = sshll.u32 [#allocation8], 4
      %s50 = int_to_ptr.vmem [resolvable:$true] %s49
      %55 = dma.hbm_to_vmem [thread:$0]  %s3, 1024, %s50, [#allocation7], 64, 64, 4
    $region17: #{tpu_custom_call.1} parent=1 // pred_fallthru
      _
    // Predicated region
    $region18: #{tpu_custom_call.1} parent=1 // pred_check
      _
    $region19: #{tpu_custom_call.1} parent=1 // pred_check_branch
      %57 = sbr.rel (0) target = $region21
    $region20: #{tpu_custom_call.1} parent=1 // pred_region
      %s59 = ssub.s32 2048, 2048
      %60 = vsyncadd [#allocation10], %s59
      %s61 = sshll.u32 [#allocation9], 4
      %s62 = int_to_ptr.vmem [resolvable:$true] %s61
      %67 = dma.hbm_to_vmem [thread:$0]  %s4, 2048, %s62, [#allocation10], 128, 128, 8
    $region21: #{tpu_custom_call.1} parent=1 // pred_fallthru
      _
    // Predicated region
    $region22: #{tpu_custom_call.1} parent=1 // pred_check
      _
    $region23: #{tpu_custom_call.1} parent=1 // pred_check_branch
      %69 = sbr.rel (0) target = $region25
    $region24: #{tpu_custom_call.1} parent=1 // pred_region
      _
    $region25: #{tpu_custom_call.1} parent=1 // pred_fallthru
      _
    // Predicated region
    $region26: #{tpu_custom_call.1} parent=1 // pred_check
      _
    $region27: #{tpu_custom_call.1} parent=1 // pred_check_branch
      %71 = sbr.rel (0) target = $region29
    $region28: #{tpu_custom_call.1} parent=1 // pred_region
      %72 = dma.done [#allocation4], 1024
    $region29: #{tpu_custom_call.1} parent=1 // pred_fallthru
      _
    // Predicated region
    $region30: #{tpu_custom_call.1} parent=1 // pred_check
      _
    $region31: #{tpu_custom_call.1} parent=1 // pred_check_branch
      %74 = sbr.rel (0) target = $region33
    $region32: #{tpu_custom_call.1} parent=1 // pred_region
      %75 = dma.done [#allocation7], 256
    $region33: #{tpu_custom_call.1} parent=1 // pred_fallthru
      _
    // Predicated region
    $region34: #{tpu_custom_call.1} parent=1 // pred_check
      _
    $region35: #{tpu_custom_call.1} parent=1 // pred_check_branch
      %77 = sbr.rel (0) target = $region37
    $region36: #{tpu_custom_call.1} parent=1 // pred_region
      %78 = dma.done [#allocation7], 1024
    $region37: #{tpu_custom_call.1} parent=1 // pred_fallthru
      _
    // Predicated region
    $region38: #{tpu_custom_call.1} parent=1 // pred_check
      _
    $region39: #{tpu_custom_call.1} parent=1 // pred_check_branch
      %80 = sbr.rel (0) target = $region41
    $region40: #{tpu_custom_call.1} parent=1 // pred_region
      %81 = dma.done [#allocation10], 2048
    $region41: #{tpu_custom_call.1} parent=1 // pred_fallthru
      _
    %p83 = scmp.eq.s32.totalorder 0, 0
    // Predicated region
    $region42: #{tpu_custom_call.1} parent=1 // pred_check
      %p84 = pneg %p83
    $region43: #{tpu_custom_call.1} parent=1 // pred_check_branch
      %86 = sbr.rel (%p84) target = $region45
    $region44: #{tpu_custom_call.1} parent=1 // pred_region
      %87 = vst [vmem:[#allocation2] sm:$0xff] 0.0
    $region45: #{tpu_custom_call.1} parent=1 // pred_fallthru
      _
    %v88 = vld [vmem:[#allocation3] sm:$0xff]
    %v89 = vld [vmem:[#allocation3 + $0x8] sm:$0xff]
    %v90 = vld [vmem:[#allocation3 + $0x10] sm:$0xff]
    %v91 = vld [vmem:[#allocation3 + $0x18] sm:$0xff]
    %v92 = vld [vmem:[#allocation3 + $0x20] sm:$0xff]
    %v93 = vld [vmem:[#allocation3 + $0x28] sm:$0xff]
    %v94 = vld [vmem:[#allocation3 + $0x30] sm:$0xff]
    %v95 = vld [vmem:[#allocation3 + $0x38] sm:$0xff]
    %v96 = vld [vmem:[#allocation6] sm:$0xff]
    %v97 = vld [vmem:[#allocation6 + $0x8] sm:$0xff]
    %v98 = vld [vmem:[%s2] sm:$0x1]
    %v100 = vlaneseq
    %v101 = vshrl.u32 %v100, 7
    %v102 = vsub.s32 0, %v101
    %v103 = vrot.slane %v98, %v102
    %vm105 = vcmask 130048
    %v107 = vsel %vm105, %v88, 0
    %v110 = vsel %vm105, %v89, 0
    %v113 = vsel %vm105, %v90, 0
    %v116 = vsel %vm105, %v91, 0
    %v119 = vsel %vm105, %v92, 0
    %v122 = vsel %vm105, %v93, 0
    %v125 = vsel %vm105, %v94, 0
    %v128 = vsel %vm105, %v95, 0
    %130 = vmatprep.subr.mxu0 0.0
    %131 = vmatpush1.msra.mxu0 0.0
    %132 = vmatprep.subr.mxu0 0.0
    %133 = vmatpush1.msra.mxu0 0.0
    %134 = vmatprep.subr.mxu0 0.0
    %135 = vmatpush1.msra.mxu0 0.0
    %136 = vmatprep.subr.mxu0 0.0
    %137 = vmatpush1.msra.mxu0 0.0
    %138 = vmatprep.subr.mxu0 0.0
    %139 = vmatpush1.msra.mxu0 0.0
    %140 = vmatprep.subr.mxu0 0.0
    %141 = vmatpush1.msra.mxu0 0.0
    %142 = vmatprep.subr.mxu0 0.0
    %143 = vmatpush1.msra.mxu0 0.0
    %144 = vmatprep.subr.mxu0 0.0
    %145 = vmatpush1.msra.mxu0 0.0
    %146 = vmatprep.subr.mxu0 0.0
    %147 = vmatpush1.msra.mxu0 0.0
    %148 = vmatprep.subr.mxu0 0.0
    %149 = vmatpush1.msra.mxu0 0.0
    %150 = vmatprep.subr.mxu0 0.0
    %151 = vmatpush1.msra.mxu0 0.0
    %152 = vmatprep.subr.mxu0 0.0
    %153 = vmatpush1.msra.mxu0 0.0
    %154 = vmatprep.subr.mxu0 0.0
    %155 = vmatpush1.msra.mxu0 0.0
    %156 = vmatprep.subr.mxu0 0.0
    %157 = vmatpush1.msra.mxu0 0.0
    %158 = vmatprep.subr.mxu0 0.0
    %159 = vmatpush1.msra.mxu0 %v97
    %160 = vmatprep.subr.mxu0 0.0
    %161 = vmatpush1.msra.mxu0 %v96
    %162 = vmatprep.subr.mxu0 0.0
    %163 = vmatpush2.msra.mxu0 0.0
    %164 = vmatprep.subr.mxu0 0.0
    %165 = vmatpush2.msra.mxu0 0.0
    %166 = vmatprep.subr.mxu0 0.0
    %167 = vmatpush2.msra.mxu0 0.0
    %168 = vmatprep.subr.mxu0 0.0
    %169 = vmatpush2.msra.mxu0 0.0
    %170 = vmatprep.subr.mxu0 0.0
    %171 = vmatpush2.msra.mxu0 0.0
    %172 = vmatprep.subr.mxu0 0.0
    %173 = vmatpush2.msra.mxu0 0.0
    %174 = vmatprep.subr.mxu0 0.0
    %175 = vmatpush2.msra.mxu0 0.0
    %176 = vmatprep.subr.mxu0 0.0
    %177 = vmatpush2.msra.mxu0 0.0
    %178 = vmatprep.subr.mxu0 0.0
    %179 = vmatpush2.msra.mxu0 0.0
    %180 = vmatprep.subr.mxu0 0.0
    %181 = vmatpush2.msra.mxu0 0.0
    %182 = vmatprep.subr.mxu0 0.0
    %183 = vmatpush2.msra.mxu0 0.0
    %184 = vmatprep.subr.mxu0 0.0
    %185 = vmatpush2.msra.mxu0 0.0
    %186 = vmatprep.subr.mxu0 0.0
    %187 = vmatpush2.msra.mxu0 0.0
    %188 = vmatprep.subr.mxu0 0.0
    %189 = vmatpush2.msra.mxu0 0.0
    %190 = vmatprep.subr.mxu0 0.0
    %191 = vmatpush2.msra.mxu0 0.0
    %192 = vmatprep.subr.mxu0 0.0
    %193 = vmatpush2.msra.mxu0 0.0
    %194 = vmatprep.mubr.f32.mxu0 0.0
    %195 = vmatmul.mubr.f32.gmra.mxu0 %v107
    %v196 = vpop.f32.mrf.mxu0
    %v197 = vadd.f32 %v103, %v196
    %v198 = vpop.f32.mrf.mxu0
    %199 = vmatprep.mubr.f32.mxu0 0.0
    %200 = vmatmul.mubr.f32.gmra.mxu0 %v110
    %v201 = vpop.f32.mrf.mxu0
    %v202 = vadd.f32 %v103, %v201
    %v203 = vpop.f32.mrf.mxu0
    %204 = vmatprep.mubr.f32.mxu0 0.0
    %205 = vmatmul.mubr.f32.gmra.mxu0 %v113
    %v206 = vpop.f32.mrf.mxu0
    %v207 = vadd.f32 %v103, %v206
    %v208 = vpop.f32.mrf.mxu0
    %209 = vmatprep.mubr.f32.mxu0 0.0
    %210 = vmatmul.mubr.f32.gmra.mxu0 %v116
    %v211 = vpop.f32.mrf.mxu0
    %v212 = vadd.f32 %v103, %v211
    %v213 = vpop.f32.mrf.mxu0
    %214 = vmatprep.mubr.f32.mxu0 0.0
    %215 = vmatmul.mubr.f32.gmra.mxu0 %v119
    %v216 = vpop.f32.mrf.mxu0
    %v217 = vadd.f32 %v103, %v216
    %v218 = vpop.f32.mrf.mxu0
    %219 = vmatprep.mubr.f32.mxu0 0.0
    %220 = vmatmul.mubr.f32.gmra.mxu0 %v122
    %v221 = vpop.f32.mrf.mxu0
    %v222 = vadd.f32 %v103, %v221
    %v223 = vpop.f32.mrf.mxu0
    %224 = vmatprep.mubr.f32.mxu0 0.0
    %225 = vmatmul.mubr.f32.gmra.mxu0 %v125
    %v226 = vpop.f32.mrf.mxu0
    %v227 = vadd.f32 %v103, %v226
    %v228 = vpop.f32.mrf.mxu0
    %229 = vmatprep.mubr.f32.mxu0 0.0
    %230 = vmatmul.mubr.f32.gmra.mxu0 %v128
    %v231 = vpop.f32.mrf.mxu0
    %v232 = vadd.f32 %v103, %v231
    %v233 = vpop.f32.mrf.mxu0
    %234 = vdwg.mxu0
    %235 = vst [vmem:[#allocation11] sm:$0xff] %v197
    %236 = vst [vmem:[#allocation11 + $0x8] sm:$0xff] %v202
    %237 = vst [vmem:[#allocation11 + $0x10] sm:$0xff] %v207
    %238 = vst [vmem:[#allocation11 + $0x18] sm:$0xff] %v212
    %239 = vst [vmem:[#allocation11 + $0x20] sm:$0xff] %v217
    %240 = vst [vmem:[#allocation11 + $0x28] sm:$0xff] %v222
    %241 = vst [vmem:[#allocation11 + $0x30] sm:$0xff] %v227
    %242 = vst [vmem:[#allocation11 + $0x38] sm:$0xff] %v232
    %v243 = vld [vmem:[#allocation8] sm:$0xf]
    %v244 = vld [vmem:[#allocation8 + $0x4] sm:$0xf]
    %v245 = vld [vmem:[#allocation8 + $0x8] sm:$0xf]
    %v246 = vld [vmem:[#allocation8 + $0xc] sm:$0xf]
    %v247 = vld [vmem:[#allocation8 + $0x10] sm:$0xf]
    %v248 = vld [vmem:[#allocation8 + $0x14] sm:$0xf]
    %v249 = vld [vmem:[#allocation8 + $0x18] sm:$0xf]
    %v250 = vld [vmem:[#allocation8 + $0x1c] sm:$0xf]
    %v251 = vld [vmem:[#allocation8 + $0x20] sm:$0xf]
    %v252 = vld [vmem:[#allocation8 + $0x24] sm:$0xf]
    %v253 = vld [vmem:[#allocation8 + $0x28] sm:$0xf]
    %v254 = vld [vmem:[#allocation8 + $0x2c] sm:$0xf]
    %v255 = vld [vmem:[#allocation8 + $0x30] sm:$0xf]
    %v256 = vld [vmem:[#allocation8 + $0x34] sm:$0xf]
    %v257 = vld [vmem:[#allocation8 + $0x38] sm:$0xf]
    %v258 = vld [vmem:[#allocation8 + $0x3c] sm:$0xf]
    %v259 = vld [vmem:[#allocation2] sm:$0xff]
    %v260 = vld [vmem:[#allocation11] sm:$0xff]
    %v261 = vpack.c.bf16 %v259, %v259
    %v278 = vunpack.c.l.b16 %v243
    %v279 = vunpack.c.l.b16 %v244
    %v280 = vunpack.c.l.b16 %v245
    %v281 = vunpack.c.l.b16 %v246
    %v282 = vunpack.c.l.b16 %v247
    %v283 = vunpack.c.l.b16 %v248
    %v284 = vunpack.c.l.b16 %v249
    %v285 = vunpack.c.l.b16 %v250
    %v286 = vunpack.c.l.b16 %v251
    %v287 = vunpack.c.l.b16 %v252
    %v288 = vunpack.c.l.b16 %v253
    %v289 = vunpack.c.l.b16 %v254
    %v290 = vunpack.c.l.b16 %v255
    %v291 = vunpack.c.l.b16 %v256
    %v292 = vunpack.c.l.b16 %v257
    %v293 = vunpack.c.l.b16 %v258
    %v294 = vpack.c.b16 %v279, %v278
    %v295 = vpack.c.b16 %v281, %v280
    %v296 = vpack.c.b16 %v283, %v282
    %v297 = vpack.c.b16 %v285, %v284
    %v298 = vpack.c.b16 %v287, %v286
    %v299 = vpack.c.b16 %v289, %v288
    %v300 = vpack.c.b16 %v291, %v290
    %v301 = vpack.c.b16 %v293, %v292
    %310 = vmatprep.subr.bf16.mxu0 0
    %311 = vmatpush1.bf16.msra.mxu0 %v301
    %312 = vmatprep.subr.bf16.mxu0 0
    %313 = vmatpush1.bf16.msra.mxu0 %v300
    %314 = vmatprep.subr.bf16.mxu0 0
    %315 = vmatpush1.bf16.msra.mxu0 %v299
    %316 = vmatprep.subr.bf16.mxu0 0
    %317 = vmatpush1.bf16.msra.mxu0 %v298
    %318 = vmatprep.subr.bf16.mxu0 0
    %319 = vmatpush1.bf16.msra.mxu0 %v297
    %320 = vmatprep.subr.bf16.mxu0 0
    %321 = vmatpush1.bf16.msra.mxu0 %v296
    %322 = vmatprep.subr.bf16.mxu0 0
    %323 = vmatpush1.bf16.msra.mxu0 %v295
    %324 = vmatprep.subr.bf16.mxu0 0
    %325 = vmatpush1.bf16.msra.mxu0 %v294
    %326 = vmatprep.subr.bf16.mxu0 0
    %327 = vmatpush2.bf16.msra.mxu0 0
    %328 = vmatprep.subr.bf16.mxu0 0
    %329 = vmatpush2.bf16.msra.mxu0 0
    %330 = vmatprep.subr.bf16.mxu0 0
    %331 = vmatpush2.bf16.msra.mxu0 0
    %332 = vmatprep.subr.bf16.mxu0 0
    %333 = vmatpush2.bf16.msra.mxu0 0
    %334 = vmatprep.subr.bf16.mxu0 0
    %335 = vmatpush2.bf16.msra.mxu0 0
    %336 = vmatprep.subr.bf16.mxu0 0
    %337 = vmatpush2.bf16.msra.mxu0 0
    %338 = vmatprep.subr.bf16.mxu0 0
    %339 = vmatpush2.bf16.msra.mxu0 0
    %340 = vmatprep.subr.bf16.mxu0 0
    %341 = vmatpush2.bf16.msra.mxu0 0
    %342 = vmatprep.mubr.bf16.mxu0 0
    %343 = vmatmul.mubr.bf16.gmra.mxu0 %v261
    %v344 = vpop.f32.mrf.mxu0
    %v345 = vadd.f32 0.0, %v344
    %v346 = vpop.f32.mrf.mxu0
    %v347 = vpop.f32.mrf.mxu0
    %v348 = vpop.f32.mrf.mxu0
    %349 = vdwg.mxu0
    %v350 = vadd.f32 %v260, %v345
    %v351 = vtanh.pop %v350
    %352 = vst [vmem:[#allocation11] sm:$0xff] %v351
    %s353 = scalar_lea.vmem [#allocation11], 8
    %v354 = vld [vmem:[%s353] sm:$0xff]
    %v355 = vpack.c.bf16 %v351, %v351
    %356 = vmatprep.subr.bf16.mxu0 0
    %357 = vmatpush1.bf16.msra.mxu0 %v301
    %358 = vmatprep.subr.bf16.mxu0 0
    %359 = vmatpush1.bf16.msra.mxu0 %v300
    %360 = vmatprep.subr.bf16.mxu0 0
    %361 = vmatpush1.bf16.msra.mxu0 %v299
    %362 = vmatprep.subr.bf16.mxu0 0
    %363 = vmatpush1.bf16.msra.mxu0 %v298
    %364 = vmatprep.subr.bf16.mxu0 0
    %365 = vmatpush1.bf16.msra.mxu0 %v297
    %366 = vmatprep.subr.bf16.mxu0 0
    %367 = vmatpush1.bf16.msra.mxu0 %v296
    %368 = vmatprep.subr.bf16.mxu0 0
    %369 = vmatpush1.bf16.msra.mxu0 %v295
    %370 = vmatprep.subr.bf16.mxu0 0
    %371 = vmatpush1.bf16.msra.mxu0 %v294
    %372 = vmatprep.subr.bf16.mxu0 0
    %373 = vmatpush2.bf16.msra.mxu0 0
    %374 = vmatprep.subr.bf16.mxu0 0
    %375 = vmatpush2.bf16.msra.mxu0 0
    %376 = vmatprep.subr.bf16.mxu0 0
    %377 = vmatpush2.bf16.msra.mxu0 0
    %378 = vmatprep.subr.bf16.mxu0 0
    %379 = vmatpush2.bf16.msra.mxu0 0
    %380 = vmatprep.subr.bf16.mxu0 0
    %381 = vmatpush2.bf16.msra.mxu0 0
    %382 = vmatprep.subr.bf16.mxu0 0
    %383 = vmatpush2.bf16.msra.mxu0 0
    %384 = vmatprep.subr.bf16.mxu0 0
    %385 = vmatpush2.bf16.msra.mxu0 0
    %386 = vmatprep.subr.bf16.mxu0 0
    %387 = vmatpush2.bf16.msra.mxu0 0
    %388 = vmatprep.mubr.bf16.mxu0 0
    %389 = vmatmul.mubr.bf16.gmra.mxu0 %v355
    %v390 = vpop.f32.mrf.mxu0
    %v391 = vadd.f32 0.0, %v390
    %v392 = vpop.f32.mrf.mxu0
    %v393 = vpop.f32.mrf.mxu0
    %v394 = vpop.f32.mrf.mxu0
    %395 = vdwg.mxu0
    %v396 = vadd.f32 %v354, %v391
    %v397 = vtanh.pop %v396
    %398 = vst [vmem:[%s353] sm:$0xff] %v397
    %s399 = scalar_lea.vmem [#allocation11], 16
    %v400 = vld [vmem:[%s399] sm:$0xff]
    %v401 = vpack.c.bf16 %v397, %v397
    %402 = vmatprep.subr.bf16.mxu0 0
    %403 = vmatpush1.bf16.msra.mxu0 %v301
    %404 = vmatprep.subr.bf16.mxu0 0
    %405 = vmatpush1.bf16.msra.mxu0 %v300
    %406 = vmatprep.subr.bf16.mxu0 0
    %407 = vmatpush1.bf16.msra.mxu0 %v299
    %408 = vmatprep.subr.bf16.mxu0 0
    %409 = vmatpush1.bf16.msra.mxu0 %v298
    %410 = vmatprep.subr.bf16.mxu0 0
    %411 = vmatpush1.bf16.msra.mxu0 %v297
    %412 = vmatprep.subr.bf16.mxu0 0
    %413 = vmatpush1.bf16.msra.mxu0 %v296
    %414 = vmatprep.subr.bf16.mxu0 0
    %415 = vmatpush1.bf16.msra.mxu0 %v295
    %416 = vmatprep.subr.bf16.mxu0 0
    %417 = vmatpush1.bf16.msra.mxu0 %v294
    %418 = vmatprep.subr.bf16.mxu0 0
    %419 = vmatpush2.bf16.msra.mxu0 0
    %420 = vmatprep.subr.bf16.mxu0 0
    %421 = vmatpush2.bf16.msra.mxu0 0
    %422 = vmatprep.subr.bf16.mxu0 0
    %423 = vmatpush2.bf16.msra.mxu0 0
    %424 = vmatprep.subr.bf16.mxu0 0
    %425 = vmatpush2.bf16.msra.mxu0 0
    %426 = vmatprep.subr.bf16.mxu0 0
    %427 = vmatpush2.bf16.msra.mxu0 0
    %428 = vmatprep.subr.bf16.mxu0 0
    %429 = vmatpush2.bf16.msra.mxu0 0
    %430 = vmatprep.subr.bf16.mxu0 0
    %431 = vmatpush2.bf16.msra.mxu0 0
    %432 = vmatprep.subr.bf16.mxu0 0
    %433 = vmatpush2.bf16.msra.mxu0 0
    %434 = vmatprep.mubr.bf16.mxu0 0
    %435 = vmatmul.mubr.bf16.gmra.mxu0 %v401
    %v436 = vpop.f32.mrf.mxu0
    %v437 = vadd.f32 0.0, %v436
    %v438 = vpop.f32.mrf.mxu0
    %v439 = vpop.f32.mrf.mxu0
    %v440 = vpop.f32.mrf.mxu0
    %441 = vdwg.mxu0
    %v442 = vadd.f32 %v400, %v437
    %v443 = vtanh.pop %v442
    %444 = vst [vmem:[%s399] sm:$0xff] %v443
    %s445 = scalar_lea.vmem [#allocation11], 24
    %v446 = vld [vmem:[%s445] sm:$0xff]
    %v447 = vpack.c.bf16 %v443, %v443
    %448 = vmatprep.subr.bf16.mxu0 0
    %449 = vmatpush1.bf16.msra.mxu0 %v301
    %450 = vmatprep.subr.bf16.mxu0 0
    %451 = vmatpush1.bf16.msra.mxu0 %v300
    %452 = vmatprep.subr.bf16.mxu0 0
    %453 = vmatpush1.bf16.msra.mxu0 %v299
    %454 = vmatprep.subr.bf16.mxu0 0
    %455 = vmatpush1.bf16.msra.mxu0 %v298
    %456 = vmatprep.subr.bf16.mxu0 0
    %457 = vmatpush1.bf16.msra.mxu0 %v297
    %458 = vmatprep.subr.bf16.mxu0 0
    %459 = vmatpush1.bf16.msra.mxu0 %v296
    %460 = vmatprep.subr.bf16.mxu0 0
    %461 = vmatpush1.bf16.msra.mxu0 %v295
    %462 = vmatprep.subr.bf16.mxu0 0
    %463 = vmatpush1.bf16.msra.mxu0 %v294
    %464 = vmatprep.subr.bf16.mxu0 0
    %465 = vmatpush2.bf16.msra.mxu0 0
    %466 = vmatprep.subr.bf16.mxu0 0
    %467 = vmatpush2.bf16.msra.mxu0 0
    %468 = vmatprep.subr.bf16.mxu0 0
    %469 = vmatpush2.bf16.msra.mxu0 0
    %470 = vmatprep.subr.bf16.mxu0 0
    %471 = vmatpush2.bf16.msra.mxu0 0
    %472 = vmatprep.subr.bf16.mxu0 0
    %473 = vmatpush2.bf16.msra.mxu0 0
    %474 = vmatprep.subr.bf16.mxu0 0
    %475 = vmatpush2.bf16.msra.mxu0 0
    %476 = vmatprep.subr.bf16.mxu0 0
    %477 = vmatpush2.bf16.msra.mxu0 0
    %478 = vmatprep.subr.bf16.mxu0 0
    %479 = vmatpush2.bf16.msra.mxu0 0
    %480 = vmatprep.mubr.bf16.mxu0 0
    %481 = vmatmul.mubr.bf16.gmra.mxu0 %v447
    %v482 = vpop.f32.mrf.mxu0
    %v483 = vadd.f32 0.0, %v482
    %v484 = vpop.f32.mrf.mxu0
    %v485 = vpop.f32.mrf.mxu0
    %v486 = vpop.f32.mrf.mxu0
    %487 = vdwg.mxu0
    %v488 = vadd.f32 %v446, %v483
    %v489 = vtanh.pop %v488
    %490 = vst [vmem:[%s445] sm:$0xff] %v489
    %s491 = scalar_lea.vmem [#allocation11], 32
    %v492 = vld [vmem:[%s491] sm:$0xff]
    %v493 = vpack.c.bf16 %v489, %v489
    %494 = vmatprep.subr.bf16.mxu0 0
    %495 = vmatpush1.bf16.msra.mxu0 %v301
    %496 = vmatprep.subr.bf16.mxu0 0
    %497 = vmatpush1.bf16.msra.mxu0 %v300
    %498 = vmatprep.subr.bf16.mxu0 0
    %499 = vmatpush1.bf16.msra.mxu0 %v299
    %500 = vmatprep.subr.bf16.mxu0 0
    %501 = vmatpush1.bf16.msra.mxu0 %v298
    %502 = vmatprep.subr.bf16.mxu0 0
    %503 = vmatpush1.bf16.msra.mxu0 %v297
    %504 = vmatprep.subr.bf16.mxu0 0
    %505 = vmatpush1.bf16.msra.mxu0 %v296
    %506 = vmatprep.subr.bf16.mxu0 0
    %507 = vmatpush1.bf16.msra.mxu0 %v295
    %508 = vmatprep.subr.bf16.mxu0 0
    %509 = vmatpush1.bf16.msra.mxu0 %v294
    %510 = vmatprep.subr.bf16.mxu0 0
    %511 = vmatpush2.bf16.msra.mxu0 0
    %512 = vmatprep.subr.bf16.mxu0 0
    %513 = vmatpush2.bf16.msra.mxu0 0
    %514 = vmatprep.subr.bf16.mxu0 0
    %515 = vmatpush2.bf16.msra.mxu0 0
    %516 = vmatprep.subr.bf16.mxu0 0
    %517 = vmatpush2.bf16.msra.mxu0 0
    %518 = vmatprep.subr.bf16.mxu0 0
    %519 = vmatpush2.bf16.msra.mxu0 0
    %520 = vmatprep.subr.bf16.mxu0 0
    %521 = vmatpush2.bf16.msra.mxu0 0
    %522 = vmatprep.subr.bf16.mxu0 0
    %523 = vmatpush2.bf16.msra.mxu0 0
    %524 = vmatprep.subr.bf16.mxu0 0
    %525 = vmatpush2.bf16.msra.mxu0 0
    %526 = vmatprep.mubr.bf16.mxu0 0
    %527 = vmatmul.mubr.bf16.gmra.mxu0 %v493
    %v528 = vpop.f32.mrf.mxu0
    %v529 = vadd.f32 0.0, %v528
    %v530 = vpop.f32.mrf.mxu0
    %v531 = vpop.f32.mrf.mxu0
    %v532 = vpop.f32.mrf.mxu0
    %533 = vdwg.mxu0
    %v534 = vadd.f32 %v492, %v529
    %v535 = vtanh.pop %v534
    %536 = vst [vmem:[%s491] sm:$0xff] %v535
    %s537 = scalar_lea.vmem [#allocation11], 40
    %v538 = vld [vmem:[%s537] sm:$0xff]
    %v539 = vpack.c.bf16 %v535, %v535
    %540 = vmatprep.subr.bf16.mxu0 0
    %541 = vmatpush1.bf16.msra.mxu0 %v301
    %542 = vmatprep.subr.bf16.mxu0 0
    %543 = vmatpush1.bf16.msra.mxu0 %v300
    %544 = vmatprep.subr.bf16.mxu0 0
    %545 = vmatpush1.bf16.msra.mxu0 %v299
    %546 = vmatprep.subr.bf16.mxu0 0
    %547 = vmatpush1.bf16.msra.mxu0 %v298
    %548 = vmatprep.subr.bf16.mxu0 0
    %549 = vmatpush1.bf16.msra.mxu0 %v297
    %550 = vmatprep.subr.bf16.mxu0 0
    %551 = vmatpush1.bf16.msra.mxu0 %v296
    %552 = vmatprep.subr.bf16.mxu0 0
    %553 = vmatpush1.bf16.msra.mxu0 %v295
    %554 = vmatprep.subr.bf16.mxu0 0
    %555 = vmatpush1.bf16.msra.mxu0 %v294
    %556 = vmatprep.subr.bf16.mxu0 0
    %557 = vmatpush2.bf16.msra.mxu0 0
    %558 = vmatprep.subr.bf16.mxu0 0
    %559 = vmatpush2.bf16.msra.mxu0 0
    %560 = vmatprep.subr.bf16.mxu0 0
    %561 = vmatpush2.bf16.msra.mxu0 0
    %562 = vmatprep.subr.bf16.mxu0 0
    %563 = vmatpush2.bf16.msra.mxu0 0
    %564 = vmatprep.subr.bf16.mxu0 0
    %565 = vmatpush2.bf16.msra.mxu0 0
    %566 = vmatprep.subr.bf16.mxu0 0
    %567 = vmatpush2.bf16.msra.mxu0 0
    %568 = vmatprep.subr.bf16.mxu0 0
    %569 = vmatpush2.bf16.msra.mxu0 0
    %570 = vmatprep.subr.bf16.mxu0 0
    %571 = vmatpush2.bf16.msra.mxu0 0
    %572 = vmatprep.mubr.bf16.mxu0 0
    %573 = vmatmul.mubr.bf16.gmra.mxu0 %v539
    %v574 = vpop.f32.mrf.mxu0
    %v575 = vadd.f32 0.0, %v574
    %v576 = vpop.f32.mrf.mxu0
    %v577 = vpop.f32.mrf.mxu0
    %v578 = vpop.f32.mrf.mxu0
    %579 = vdwg.mxu0
    %v580 = vadd.f32 %v538, %v575
    %v581 = vtanh.pop %v580
    %582 = vst [vmem:[%s537] sm:$0xff] %v581
    %s583 = scalar_lea.vmem [#allocation11], 48
    %v584 = vld [vmem:[%s583] sm:$0xff]
    %v585 = vpack.c.bf16 %v581, %v581
    %586 = vmatprep.subr.bf16.mxu0 0
    %587 = vmatpush1.bf16.msra.mxu0 %v301
    %588 = vmatprep.subr.bf16.mxu0 0
    %589 = vmatpush1.bf16.msra.mxu0 %v300
    %590 = vmatprep.subr.bf16.mxu0 0
    %591 = vmatpush1.bf16.msra.mxu0 %v299
    %592 = vmatprep.subr.bf16.mxu0 0
    %593 = vmatpush1.bf16.msra.mxu0 %v298
    %594 = vmatprep.subr.bf16.mxu0 0
    %595 = vmatpush1.bf16.msra.mxu0 %v297
    %596 = vmatprep.subr.bf16.mxu0 0
    %597 = vmatpush1.bf16.msra.mxu0 %v296
    %598 = vmatprep.subr.bf16.mxu0 0
    %599 = vmatpush1.bf16.msra.mxu0 %v295
    %600 = vmatprep.subr.bf16.mxu0 0
    %601 = vmatpush1.bf16.msra.mxu0 %v294
    %602 = vmatprep.subr.bf16.mxu0 0
    %603 = vmatpush2.bf16.msra.mxu0 0
    %604 = vmatprep.subr.bf16.mxu0 0
    %605 = vmatpush2.bf16.msra.mxu0 0
    %606 = vmatprep.subr.bf16.mxu0 0
    %607 = vmatpush2.bf16.msra.mxu0 0
    %608 = vmatprep.subr.bf16.mxu0 0
    %609 = vmatpush2.bf16.msra.mxu0 0
    %610 = vmatprep.subr.bf16.mxu0 0
    %611 = vmatpush2.bf16.msra.mxu0 0
    %612 = vmatprep.subr.bf16.mxu0 0
    %613 = vmatpush2.bf16.msra.mxu0 0
    %614 = vmatprep.subr.bf16.mxu0 0
    %615 = vmatpush2.bf16.msra.mxu0 0
    %616 = vmatprep.subr.bf16.mxu0 0
    %617 = vmatpush2.bf16.msra.mxu0 0
    %618 = vmatprep.mubr.bf16.mxu0 0
    %619 = vmatmul.mubr.bf16.gmra.mxu0 %v585
    %v620 = vpop.f32.mrf.mxu0
    %v621 = vadd.f32 0.0, %v620
    %v622 = vpop.f32.mrf.mxu0
    %v623 = vpop.f32.mrf.mxu0
    %v624 = vpop.f32.mrf.mxu0
    %625 = vdwg.mxu0
    %v626 = vadd.f32 %v584, %v621
    %v627 = vtanh.pop %v626
    %628 = vst [vmem:[%s583] sm:$0xff] %v627
    %s629 = scalar_lea.vmem [#allocation11], 56
    %v630 = vld [vmem:[%s629] sm:$0xff]
    %v631 = vpack.c.bf16 %v627, %v627
    %632 = vmatprep.subr.bf16.mxu0 0
    %633 = vmatpush1.bf16.msra.mxu0 %v301
    %634 = vmatprep.subr.bf16.mxu0 0
    %635 = vmatpush1.bf16.msra.mxu0 %v300
    %636 = vmatprep.subr.bf16.mxu0 0
    %637 = vmatpush1.bf16.msra.mxu0 %v299
    %638 = vmatprep.subr.bf16.mxu0 0
    %639 = vmatpush1.bf16.msra.mxu0 %v298
    %640 = vmatprep.subr.bf16.mxu0 0
    %641 = vmatpush1.bf16.msra.mxu0 %v297
    %642 = vmatprep.subr.bf16.mxu0 0
    %643 = vmatpush1.bf16.msra.mxu0 %v296
    %644 = vmatprep.subr.bf16.mxu0 0
    %645 = vmatpush1.bf16.msra.mxu0 %v295
    %646 = vmatprep.subr.bf16.mxu0 0
    %647 = vmatpush1.bf16.msra.mxu0 %v294
    %648 = vmatprep.subr.bf16.mxu0 0
    %649 = vmatpush2.bf16.msra.mxu0 0
    %650 = vmatprep.subr.bf16.mxu0 0
    %651 = vmatpush2.bf16.msra.mxu0 0
    %652 = vmatprep.subr.bf16.mxu0 0
    %653 = vmatpush2.bf16.msra.mxu0 0
    %654 = vmatprep.subr.bf16.mxu0 0
    %655 = vmatpush2.bf16.msra.mxu0 0
    %656 = vmatprep.subr.bf16.mxu0 0
    %657 = vmatpush2.bf16.msra.mxu0 0
    %658 = vmatprep.subr.bf16.mxu0 0
    %659 = vmatpush2.bf16.msra.mxu0 0
    %660 = vmatprep.subr.bf16.mxu0 0
    %661 = vmatpush2.bf16.msra.mxu0 0
    %662 = vmatprep.subr.bf16.mxu0 0
    %663 = vmatpush2.bf16.msra.mxu0 0
    %664 = vmatprep.mubr.bf16.mxu0 0
    %665 = vmatmul.mubr.bf16.gmra.mxu0 %v631
    %v666 = vpop.f32.mrf.mxu0
    %v667 = vadd.f32 0.0, %v666
    %v668 = vpop.f32.mrf.mxu0
    %v669 = vpop.f32.mrf.mxu0
    %v670 = vpop.f32.mrf.mxu0
    %671 = vdwg.mxu0
    %v672 = vadd.f32 %v630, %v667
    %v673 = vtanh.pop %v672
    %674 = vst [vmem:[%s629] sm:$0xff] %v673
    %675 = vst [vmem:[#allocation2] sm:$0xff] %v673
    %v676 = vld [vmem:[#allocation11] sm:$0xff]
    %v677 = vld [vmem:[#allocation11 + $0x8] sm:$0xff]
    %v678 = vld [vmem:[#allocation11 + $0x10] sm:$0xff]
    %v679 = vld [vmem:[#allocation11 + $0x18] sm:$0xff]
    %v680 = vld [vmem:[#allocation11 + $0x20] sm:$0xff]
    %v681 = vld [vmem:[#allocation11 + $0x28] sm:$0xff]
    %v682 = vld [vmem:[#allocation11 + $0x30] sm:$0xff]
    %v683 = vld [vmem:[#allocation11 + $0x38] sm:$0xff]
    %v684 = vld [vmem:[#allocation9] sm:$0xff]
    %v685 = vld [vmem:[#allocation9 + $0x8] sm:$0xff]
    %v686 = vld [vmem:[#allocation9 + $0x10] sm:$0xff]
    %v687 = vld [vmem:[#allocation9 + $0x18] sm:$0xff]
    %v688 = vld [vmem:[#allocation9 + $0x20] sm:$0xff]
    %v689 = vld [vmem:[#allocation9 + $0x28] sm:$0xff]
    %v690 = vld [vmem:[#allocation9 + $0x30] sm:$0xff]
    %v691 = vld [vmem:[#allocation9 + $0x38] sm:$0xff]
    %v692 = vld [vmem:[#allocation9 + $0x40] sm:$0xff]
    %v693 = vld [vmem:[#allocation9 + $0x48] sm:$0xff]
    %v694 = vld [vmem:[#allocation9 + $0x50] sm:$0xff]
    %v695 = vld [vmem:[#allocation9 + $0x58] sm:$0xff]
    %v696 = vld [vmem:[#allocation9 + $0x60] sm:$0xff]
    %v697 = vld [vmem:[#allocation9 + $0x68] sm:$0xff]
    %v698 = vld [vmem:[#allocation9 + $0x70] sm:$0xff]
    %v699 = vld [vmem:[#allocation9 + $0x78] sm:$0xff]
    %v700 = vld [vmem:[%s5] sm:$0x1]
    %v702 = vlaneseq
    %v703 = vshrl.u32 %v702, 7
    %v704 = vsub.s32 0, %v703
    %v705 = vrot.slane %v700, %v704
    %707 = vmatprep.subr.mxu0 0.0
    %708 = vmatpush1.msra.mxu0 %v699
    %709 = vmatprep.subr.mxu0 0.0
    %710 = vmatpush1.msra.mxu0 %v698
    %711 = vmatprep.subr.mxu0 0.0
    %712 = vmatpush1.msra.mxu0 %v697
    %713 = vmatprep.subr.mxu0 0.0
    %714 = vmatpush1.msra.mxu0 %v696
    %715 = vmatprep.subr.mxu0 0.0
    %716 = vmatpush1.msra.mxu0 %v695
    %717 = vmatprep.subr.mxu0 0.0
    %718 = vmatpush1.msra.mxu0 %v694
    %719 = vmatprep.subr.mxu0 0.0
    %720 = vmatpush1.msra.mxu0 %v693
    %721 = vmatprep.subr.mxu0 0.0
    %722 = vmatpush1.msra.mxu0 %v692
    %723 = vmatprep.subr.mxu0 0.0
    %724 = vmatpush1.msra.mxu0 %v691
    %725 = vmatprep.subr.mxu0 0.0
    %726 = vmatpush1.msra.mxu0 %v690
    %727 = vmatprep.subr.mxu0 0.0
    %728 = vmatpush1.msra.mxu0 %v689
    %729 = vmatprep.subr.mxu0 0.0
    %730 = vmatpush1.msra.mxu0 %v688
    %731 = vmatprep.subr.mxu0 0.0
    %732 = vmatpush1.msra.mxu0 %v687
    %733 = vmatprep.subr.mxu0 0.0
    %734 = vmatpush1.msra.mxu0 %v686
    %735 = vmatprep.subr.mxu0 0.0
    %736 = vmatpush1.msra.mxu0 %v685
    %737 = vmatprep.subr.mxu0 0.0
    %738 = vmatpush1.msra.mxu0 %v684
    %739 = vmatprep.subr.mxu0 0.0
    %740 = vmatpush2.msra.mxu0 0.0
    %741 = vmatprep.subr.mxu0 0.0
    %742 = vmatpush2.msra.mxu0 0.0
    %743 = vmatprep.subr.mxu0 0.0
    %744 = vmatpush2.msra.mxu0 0.0
    %745 = vmatprep.subr.mxu0 0.0
    %746 = vmatpush2.msra.mxu0 0.0
    %747 = vmatprep.subr.mxu0 0.0
    %748 = vmatpush2.msra.mxu0 0.0
    %749 = vmatprep.subr.mxu0 0.0
    %750 = vmatpush2.msra.mxu0 0.0
    %751 = vmatprep.subr.mxu0 0.0
    %752 = vmatpush2.msra.mxu0 0.0
    %753 = vmatprep.subr.mxu0 0.0
    %754 = vmatpush2.msra.mxu0 0.0
    %755 = vmatprep.subr.mxu0 0.0
    %756 = vmatpush2.msra.mxu0 0.0
    %757 = vmatprep.subr.mxu0 0.0
    %758 = vmatpush2.msra.mxu0 0.0
    %759 = vmatprep.subr.mxu0 0.0
    %760 = vmatpush2.msra.mxu0 0.0
    %761 = vmatprep.subr.mxu0 0.0
    %762 = vmatpush2.msra.mxu0 0.0
    %763 = vmatprep.subr.mxu0 0.0
    %764 = vmatpush2.msra.mxu0 0.0
    %765 = vmatprep.subr.mxu0 0.0
    %766 = vmatpush2.msra.mxu0 0.0
    %767 = vmatprep.subr.mxu0 0.0
    %768 = vmatpush2.msra.mxu0 0.0
    %769 = vmatprep.subr.mxu0 0.0
    %770 = vmatpush2.msra.mxu0 0.0
    %771 = vmatprep.mubr.f32.mxu0 0.0
    %772 = vmatmul.mubr.f32.gmra.mxu0 %v676
    %v773 = vpop.f32.mrf.mxu0
    %v774 = vadd.f32 %v705, %v773
    %v775 = vpop.f32.mrf.mxu0
    %776 = vmatprep.mubr.f32.mxu0 0.0
    %777 = vmatmul.mubr.f32.gmra.mxu0 %v677
    %v778 = vpop.f32.mrf.mxu0
    %v779 = vadd.f32 %v705, %v778
    %v780 = vpop.f32.mrf.mxu0
    %781 = vmatprep.mubr.f32.mxu0 0.0
    %782 = vmatmul.mubr.f32.gmra.mxu0 %v678
    %v783 = vpop.f32.mrf.mxu0
    %v784 = vadd.f32 %v705, %v783
    %v785 = vpop.f32.mrf.mxu0
    %786 = vmatprep.mubr.f32.mxu0 0.0
    %787 = vmatmul.mubr.f32.gmra.mxu0 %v679
    %v788 = vpop.f32.mrf.mxu0
    %v789 = vadd.f32 %v705, %v788
    %v790 = vpop.f32.mrf.mxu0
    %791 = vmatprep.mubr.f32.mxu0 0.0
    %792 = vmatmul.mubr.f32.gmra.mxu0 %v680
    %v793 = vpop.f32.mrf.mxu0
    %v794 = vadd.f32 %v705, %v793
    %v795 = vpop.f32.mrf.mxu0
    %796 = vmatprep.mubr.f32.mxu0 0.0
    %797 = vmatmul.mubr.f32.gmra.mxu0 %v681
    %v798 = vpop.f32.mrf.mxu0
    %v799 = vadd.f32 %v705, %v798
    %v800 = vpop.f32.mrf.mxu0
    %801 = vmatprep.mubr.f32.mxu0 0.0
    %802 = vmatmul.mubr.f32.gmra.mxu0 %v682
    %v803 = vpop.f32.mrf.mxu0
    %v804 = vadd.f32 %v705, %v803
    %v805 = vpop.f32.mrf.mxu0
    %806 = vmatprep.mubr.f32.mxu0 0.0
    %807 = vmatmul.mubr.f32.gmra.mxu0 %v683
    %v808 = vpop.f32.mrf.mxu0
    %v809 = vadd.f32 %v705, %v808
    %v810 = vpop.f32.mrf.mxu0
    %811 = vdwg.mxu0
    %812 = vst [vmem:[#allocation12] sm:$0xff] %v774
    %813 = vst [vmem:[#allocation12 + $0x8] sm:$0xff] %v779
    %814 = vst [vmem:[#allocation12 + $0x10] sm:$0xff] %v784
    %815 = vst [vmem:[#allocation12 + $0x18] sm:$0xff] %v789
    %816 = vst [vmem:[#allocation12 + $0x20] sm:$0xff] %v794
    %817 = vst [vmem:[#allocation12 + $0x28] sm:$0xff] %v799
    %818 = vst [vmem:[#allocation12 + $0x30] sm:$0xff] %v804
    %819 = vst [vmem:[#allocation12 + $0x38] sm:$0xff] %v809
    // Predicated region
    $region46: #{tpu_custom_call.1} parent=1 // pred_check
      _
    $region47: #{tpu_custom_call.1} parent=1 // pred_check_branch
      %821 = sbr.rel (0) target = $region49
    $region48: #{tpu_custom_call.1} parent=1 // pred_region
      %s823 = ssub.s32 1024, 1024
      %824 = vsyncadd [#allocation5], %s823
      %s825 = sshll.u32 [#allocation11], 4
      %s826 = int_to_ptr.vmem [resolvable:$true] %s825
      %831 = dma.vmem_to_hbm [thread:$0]  %s826, 1024, %s6, [#allocation5], 128, 128, 8
    $region49: #{tpu_custom_call.1} parent=1 // pred_fallthru
      _
    // Predicated region
    $region50: #{tpu_custom_call.1} parent=1 // pred_check
      _
    $region51: #{tpu_custom_call.1} parent=1 // pred_check_branch
      %833 = sbr.rel (0) target = $region53
    $region52: #{tpu_custom_call.1} parent=1 // pred_region
      %s835 = ssub.s32 1024, 1024
      %836 = vsyncadd [#allocation13], %s835
      %s837 = sshll.u32 [#allocation12], 4
      %s838 = int_to_ptr.vmem [resolvable:$true] %s837
      %843 = dma.vmem_to_hbm [thread:$0]  %s838, 1024, %s7, [#allocation13], 128, 128, 8
    $region53: #{tpu_custom_call.1} parent=1 // pred_fallthru
      _
    // Predicated region
    $region54: #{tpu_custom_call.1} parent=1 // pred_check
      _
    $region55: #{tpu_custom_call.1} parent=1 // pred_check_branch
      %845 = sbr.rel (0) target = $region57
    $region56: #{tpu_custom_call.1} parent=1 // pred_region
      %846 = dma.done [#allocation5], 1024
    $region57: #{tpu_custom_call.1} parent=1 // pred_fallthru
      _
    // Predicated region
    $region58: #{tpu_custom_call.1} parent=1 // pred_check
      _
    $region59: #{tpu_custom_call.1} parent=1 // pred_check_branch
      %848 = sbr.rel (0) target = $region61
    $region60: #{tpu_custom_call.1} parent=1 // pred_region
      %849 = dma.done [#allocation13], 1024
    $region61: #{tpu_custom_call.1} parent=1 // pred_fallthru
      _
    %850 = vsyncpa [#allocation4], 1
    %851 = vsyncpa [#allocation7], 1
    %852 = vsyncpa [#allocation10], 1
    %853 = vsyncpa [#allocation5], 1
    %854 = vsyncpa [#allocation13], 1

// kernel: tpu_custom_call.1
$region0: #{tpu_custom_call.1}
  #allocation0 [shape = 'u32[]', space=smem, size = 0x4, offset = 0x4, fixed_abs, tag = 'smem constant byte address 0x4 - core index']
  #allocation1 [shape = 'u32[144,128]{1,0:T(1,128)}', space=vmem, size = 0x12000, scoped, tag = 'internal scratch']
  #allocation2 [shape = 'f32[8,128]{1,0:T(8,128)}', space=vmem, size = 0x1000, scoped, tag = 'scratch operand']
  %s0 = inlined_call_operand.hbm [shape: f32[8,8,16], index: 0, kind: input, shape index: {}]
  %s1 = inlined_call_operand.hbm [shape: f32[16,128], index: 1, kind: input, shape index: {}]
  %s2 = inlined_call_operand.vmem [shape: f32[1,128], index: 2, kind: input, shape index: {}]
  %s3 = inlined_call_operand.hbm [shape: bf16[128,128], index: 3, kind: input, shape index: {}]
  %s4 = inlined_call_operand.hbm [shape: f32[128,128], index: 4, kind: input, shape index: {}]
  %s5 = inlined_call_operand.vmem [shape: f32[1,128], index: 5, kind: input, shape index: {}]
  %s6 = inlined_call_operand.hbm [shape: f32[8,8,128], index: 6, kind: output, shape index: {0}]
  %s7 = inlined_call_operand.hbm [shape: f32[8,8,128], index: 7, kind: output, shape index: {1}]
  %8 = xla_tuple %s6, %s7
  %s9 = sld [smem:[#allocation0]]
  $region62: #{tpu_custom_call.1} parent=0
    _
  %s11 = ssub.s32 1, %s9
  %s12 = scalar_select 0, %s11, %s9
  $region1: #{tpu_custom_call.1} parent=0
    #allocation3 [shape = 'u8[32768]{0}', space=vmem, size = 0x8000, scoped, tag = 'input window, operand 0, single buffered']
    #allocation4 [shape = 's32[1]{0}', space=sflag, size = 0x4, scoped, tag = 'scoped memory for tpu_custom_call.1']
    #allocation5 [shape = 's32[1]{0}', space=sflag, size = 0x4, scoped, tag = 'scoped memory for tpu_custom_call.1']
    #allocation6 [shape = 'u8[8192]{0}', space=vmem, size = 0x2000, scoped, tag = 'input window, operand 1, single buffered']
    #allocation7 [shape = 's32[1]{0}', space=sflag, size = 0x4, scoped, tag = 'scoped memory for tpu_custom_call.1']
    #allocation8 [shape = 'u8[32768]{0}', space=vmem, size = 0x8000, scoped, tag = 'input window, operand 3, single buffered']
    #allocation9 [shape = 'u8[65536]{0}', space=vmem, size = 0x10000, scoped, tag = 'input window, operand 4, single buffered']
    #allocation10 [shape = 's32[1]{0}', space=sflag, size = 0x4, scoped, tag = 'scoped memory for tpu_custom_call.1']
    #allocation11 [shape = 'u8[32768]{0}', space=vmem, size = 0x8000, scoped, tag = 'output window, operand 0, single buffered']
    #allocation12 [shape = 'u8[32768]{0}', space=vmem, size = 0x8000, scoped, tag = 'output window, operand 1, single buffered']
    #allocation13 [shape = 's32[1]{0}', space=sflag, size = 0x4, scoped, tag = 'scoped memory for tpu_custom_call.1']
    %13 = vsyncpa [#allocation4], 0
    %14 = vsyncpa [#allocation7], 0
    %15 = vsyncpa [#allocation10], 0
    %16 = vsyncpa [#allocation5], 0
    %17 = vsyncpa [#allocation13], 0
    // Predicated region
    $region2: #{tpu_custom_call.1} parent=1 // pred_check
      _
    $region3: #{tpu_custom_call.1} parent=1 // pred_check_branch
      %19 = sbr.rel (0) target = $region5
    $region4: #{tpu_custom_call.1} parent=1 // pred_region
      %s21 = ssub.s32 1024, 1024
      %22 = vsyncadd [#allocation4], %s21
      %s23 = sshll.u32 [#allocation3], 4
      %s24 = int_to_ptr.vmem [resolvable:$true] %s23
      %29 = dma.hbm_to_vmem [thread:$0]  %s0, 1024, %s24, [#allocation4], 128, 128, 8
    $region5: #{tpu_custom_call.1} parent=1 // pred_fallthru
      _
    // Predicated region
    $region6: #{tpu_custom_call.1} parent=1 // pred_check
      _
    $region7: #{tpu_custom_call.1} parent=1 // pred_check_branch
      %31 = sbr.rel (0) target = $region9
    $region8: #{tpu_custom_call.1} parent=1 // pred_region
      %s33 = ssub.s32 256, 256
      %34 = vsyncadd [#allocation7], %s33
      %s35 = sshll.u32 [#allocation6], 4
      %s36 = int_to_ptr.vmem [resolvable:$true] %s35
      %41 = dma.hbm_to_vmem [thread:$0]  %s1, 256, %s36, [#allocation7], 128, 128, 8
    $region9: #{tpu_custom_call.1} parent=1 // pred_fallthru
      _
    // Predicated region
    $region10: #{tpu_custom_call.1} parent=1 // pred_check
      _
    $region11: #{tpu_custom_call.1} parent=1 // pred_check_branch
      %43 = sbr.rel (0) target = $region13
    $region12: #{tpu_custom_call.1} parent=1 // pred_region
      _
    $region13: #{tpu_custom_call.1} parent=1 // pred_fallthru
      _
    // Predicated region
    $region14: #{tpu_custom_call.1} parent=1 // pred_check
      _
    $region15: #{tpu_custom_call.1} parent=1 // pred_check_branch
      %45 = sbr.rel (0) target = $region17
    $region16: #{tpu_custom_call.1} parent=1 // pred_region
      %s47 = ssub.s32 1024, 1024
      %48 = vsyncadd [#allocation7], %s47
      %s49 = sshll.u32 [#allocation8], 4
      %s50 = int_to_ptr.vmem [resolvable:$true] %s49
      %55 = dma.hbm_to_vmem [thread:$0]  %s3, 1024, %s50, [#allocation7], 64, 64, 4
    $region17: #{tpu_custom_call.1} parent=1 // pred_fallthru
      _
    // Predicated region
    $region18: #{tpu_custom_call.1} parent=1 // pred_check
      _
    $region19: #{tpu_custom_call.1} parent=1 // pred_check_branch
      %57 = sbr.rel (0) target = $region21
    $region20: #{tpu_custom_call.1} parent=1 // pred_region
      %s59 = ssub.s32 2048, 2048
      %60 = vsyncadd [#allocation10], %s59
      %s61 = sshll.u32 [#allocation9], 4
      %s62 = int_to_ptr.vmem [resolvable:$true] %s61
      %67 = dma.hbm_to_vmem [thread:$0]  %s4, 2048, %s62, [#allocation10], 128, 128, 8
    $region21: #{tpu_custom_call.1} parent=1 // pred_fallthru
      _
    // Predicated region
    $region22: #{tpu_custom_call.1} parent=1 // pred_check
      _
    $region23: #{tpu_custom_call.1} parent=1 // pred_check_branch
      %69 = sbr.rel (0) target = $region25
    $region24: #{tpu_custom_call.1} parent=1 // pred_region
      _
    $region25: #{tpu_custom_call.1} parent=1 // pred_fallthru
      _
    // Predicated region
    $region26: #{tpu_custom_call.1} parent=1 // pred_check
      _
    $region27: #{tpu_custom_call.1} parent=1 // pred_check_branch
      %71 = sbr.rel (0) target = $region29
    $region28: #{tpu_custom_call.1} parent=1 // pred_region
      %72 = dma.done [#allocation4], 1024
    $region29: #{tpu_custom_call.1} parent=1 // pred_fallthru
      _
    // Predicated region
    $region30: #{tpu_custom_call.1} parent=1 // pred_check
      _
    $region31: #{tpu_custom_call.1} parent=1 // pred_check_branch
      %74 = sbr.rel (0) target = $region33
    $region32: #{tpu_custom_call.1} parent=1 // pred_region
      %75 = dma.done [#allocation7], 256
    $region33: #{tpu_custom_call.1} parent=1 // pred_fallthru
      _
    // Predicated region
    $region34: #{tpu_custom_call.1} parent=1 // pred_check
      _
    $region35: #{tpu_custom_call.1} parent=1 // pred_check_branch
      %77 = sbr.rel (0) target = $region37
    $region36: #{tpu_custom_call.1} parent=1 // pred_region
      %78 = dma.done [#allocation7], 1024
    $region37: #{tpu_custom_call.1} parent=1 // pred_fallthru
      _
    // Predicated region
    $region38: #{tpu_custom_call.1} parent=1 // pred_check
      _
    $region39: #{tpu_custom_call.1} parent=1 // pred_check_branch
      %80 = sbr.rel (0) target = $region41
    $region40: #{tpu_custom_call.1} parent=1 // pred_region
      %81 = dma.done [#allocation10], 2048
    $region41: #{tpu_custom_call.1} parent=1 // pred_fallthru
      _
    %p83 = scmp.eq.s32.totalorder 0, 0
    // Predicated region
    $region42: #{tpu_custom_call.1} parent=1 // pred_check
      %p84 = pneg %p83
    $region43: #{tpu_custom_call.1} parent=1 // pred_check_branch
      %86 = sbr.rel (%p84) target = $region45
    $region44: #{tpu_custom_call.1} parent=1 // pred_region
      %87 = vst [vmem:[#allocation2] sm:$0xff] 0.0
    $region45: #{tpu_custom_call.1} parent=1 // pred_fallthru
      _
    %v88 = vld [vmem:[#allocation3] sm:$0xff]
    %v89 = vld [vmem:[#allocation3 + $0x8] sm:$0xff]
    %v90 = vld [vmem:[#allocation3 + $0x10] sm:$0xff]
    %v91 = vld [vmem:[#allocation3 + $0x18] sm:$0xff]
    %v92 = vld [vmem:[#allocation3 + $0x20] sm:$0xff]
    %v93 = vld [vmem:[#allocation3 + $0x28] sm:$0xff]
    %v94 = vld [vmem:[#allocation3 + $0x30] sm:$0xff]
    %v95 = vld [vmem:[#allocation3 + $0x38] sm:$0xff]
    %v96 = vld [vmem:[#allocation6] sm:$0xff]
    %v97 = vld [vmem:[#allocation6 + $0x8] sm:$0xff]
    %v98 = vld [vmem:[%s2] sm:$0x1]
    %v100 = vlaneseq
    %v101 = vshrl.u32 %v100, 7
    %v102 = vsub.s32 0, %v101
    %v103 = vrot.slane %v98, %v102
    %vm105 = vcmask 130048
    %v107 = vsel %vm105, %v88, 0
    %v110 = vsel %vm105, %v89, 0
    %v113 = vsel %vm105, %v90, 0
    %v116 = vsel %vm105, %v91, 0
    %v119 = vsel %vm105, %v92, 0
    %v122 = vsel %vm105, %v93, 0
    %v125 = vsel %vm105, %v94, 0
    %v128 = vsel %vm105, %v95, 0
    %130 = vmatprep.subr.mxu0 0.0
    %131 = vmatpush1.msra.mxu0 0.0
    %132 = vmatprep.subr.mxu0 0.0
    %133 = vmatpush1.msra.mxu0 0.0
    %134 = vmatprep.subr.mxu0 0.0
    %135 = vmatpush1.msra.mxu0 0.0
    %136 = vmatprep.subr.mxu0 0.0
    %137 = vmatpush1.msra.mxu0 0.0
    %138 = vmatprep.subr.mxu0 0.0
    %139 = vmatpush1.msra.mxu0 0.0
    %140 = vmatprep.subr.mxu0 0.0
    %141 = vmatpush1.msra.mxu0 0.0
    %142 = vmatprep.subr.mxu0 0.0
    %143 = vmatpush1.msra.mxu0 0.0
    %144 = vmatprep.subr.mxu0 0.0
    %145 = vmatpush1.msra.mxu0 0.0
    %146 = vmatprep.subr.mxu0 0.0
    %147 = vmatpush1.msra.mxu0 0.0
    %148 = vmatprep.subr.mxu0 0.0
    %149 = vmatpush1.msra.mxu0 0.0
    %150 = vmatprep.subr.mxu0 0.0
    %151 = vmatpush1.msra.mxu0 0.0
    %152 = vmatprep.subr.mxu0 0.0
    %153 = vmatpush1.msra.mxu0 0.0
    %154 = vmatprep.subr.mxu0 0.0
    %155 = vmatpush1.msra.mxu0 0.0
    %156 = vmatprep.subr.mxu0 0.0
    %157 = vmatpush1.msra.mxu0 0.0
    %158 = vmatprep.subr.mxu0 0.0
    %159 = vmatpush1.msra.mxu0 %v97
    %160 = vmatprep.subr.mxu0 0.0
    %161 = vmatpush1.msra.mxu0 %v96
    %162 = vmatprep.subr.mxu0 0.0
    %163 = vmatpush2.msra.mxu0 0.0
    %164 = vmatprep.subr.mxu0 0.0
    %165 = vmatpush2.msra.mxu0 0.0
    %166 = vmatprep.subr.mxu0 0.0
    %167 = vmatpush2.msra.mxu0 0.0
    %168 = vmatprep.subr.mxu0 0.0
    %169 = vmatpush2.msra.mxu0 0.0
    %170 = vmatprep.subr.mxu0 0.0
    %171 = vmatpush2.msra.mxu0 0.0
    %172 = vmatprep.subr.mxu0 0.0
    %173 = vmatpush2.msra.mxu0 0.0
    %174 = vmatprep.subr.mxu0 0.0
    %175 = vmatpush2.msra.mxu0 0.0
    %176 = vmatprep.subr.mxu0 0.0
    %177 = vmatpush2.msra.mxu0 0.0
    %178 = vmatprep.subr.mxu0 0.0
    %179 = vmatpush2.msra.mxu0 0.0
    %180 = vmatprep.subr.mxu0 0.0
    %181 = vmatpush2.msra.mxu0 0.0
    %182 = vmatprep.subr.mxu0 0.0
    %183 = vmatpush2.msra.mxu0 0.0
    %184 = vmatprep.subr.mxu0 0.0
    %185 = vmatpush2.msra.mxu0 0.0
    %186 = vmatprep.subr.mxu0 0.0
    %187 = vmatpush2.msra.mxu0 0.0
    %188 = vmatprep.subr.mxu0 0.0
    %189 = vmatpush2.msra.mxu0 0.0
    %190 = vmatprep.subr.mxu0 0.0
    %191 = vmatpush2.msra.mxu0 0.0
    %192 = vmatprep.subr.mxu0 0.0
    %193 = vmatpush2.msra.mxu0 0.0
    %194 = vmatprep.mubr.f32.mxu0 0.0
    %195 = vmatmul.mubr.f32.gmra.mxu0 %v107
    %v196 = vpop.f32.mrf.mxu0
    %v197 = vadd.f32 %v103, %v196
    %v198 = vpop.f32.mrf.mxu0
    %199 = vmatprep.mubr.f32.mxu0 0.0
    %200 = vmatmul.mubr.f32.gmra.mxu0 %v110
    %v201 = vpop.f32.mrf.mxu0
    %v202 = vadd.f32 %v103, %v201
    %v203 = vpop.f32.mrf.mxu0
    %204 = vmatprep.mubr.f32.mxu0 0.0
    %205 = vmatmul.mubr.f32.gmra.mxu0 %v113
    %v206 = vpop.f32.mrf.mxu0
    %v207 = vadd.f32 %v103, %v206
    %v208 = vpop.f32.mrf.mxu0
    %209 = vmatprep.mubr.f32.mxu0 0.0
    %210 = vmatmul.mubr.f32.gmra.mxu0 %v116
    %v211 = vpop.f32.mrf.mxu0
    %v212 = vadd.f32 %v103, %v211
    %v213 = vpop.f32.mrf.mxu0
    %214 = vmatprep.mubr.f32.mxu0 0.0
    %215 = vmatmul.mubr.f32.gmra.mxu0 %v119
    %v216 = vpop.f32.mrf.mxu0
    %v217 = vadd.f32 %v103, %v216
    %v218 = vpop.f32.mrf.mxu0
    %219 = vmatprep.mubr.f32.mxu0 0.0
    %220 = vmatmul.mubr.f32.gmra.mxu0 %v122
    %v221 = vpop.f32.mrf.mxu0
    %v222 = vadd.f32 %v103, %v221
    %v223 = vpop.f32.mrf.mxu0
    %224 = vmatprep.mubr.f32.mxu0 0.0
    %225 = vmatmul.mubr.f32.gmra.mxu0 %v125
    %v226 = vpop.f32.mrf.mxu0
    %v227 = vadd.f32 %v103, %v226
    %v228 = vpop.f32.mrf.mxu0
    %229 = vmatprep.mubr.f32.mxu0 0.0
    %230 = vmatmul.mubr.f32.gmra.mxu0 %v128
    %v231 = vpop.f32.mrf.mxu0
    %v232 = vadd.f32 %v103, %v231
    %v233 = vpop.f32.mrf.mxu0
    %234 = vdwg.mxu0
    %235 = vst [vmem:[#allocation11] sm:$0xff] %v197
    %236 = vst [vmem:[#allocation11 + $0x8] sm:$0xff] %v202
    %237 = vst [vmem:[#allocation11 + $0x10] sm:$0xff] %v207
    %238 = vst [vmem:[#allocation11 + $0x18] sm:$0xff] %v212
    %239 = vst [vmem:[#allocation11 + $0x20] sm:$0xff] %v217
    %240 = vst [vmem:[#allocation11 + $0x28] sm:$0xff] %v222
    %241 = vst [vmem:[#allocation11 + $0x30] sm:$0xff] %v227
    %242 = vst [vmem:[#allocation11 + $0x38] sm:$0xff] %v232
    %v243 = vld [vmem:[#allocation8] sm:$0xf]
    %v244 = vld [vmem:[#allocation8 + $0x4] sm:$0xf]
    %v245 = vld [vmem:[#allocation8 + $0x8] sm:$0xf]
    %v246 = vld [vmem:[#allocation8 + $0xc] sm:$0xf]
    %v247 = vld [vmem:[#allocation8 + $0x10] sm:$0xf]
    %v248 = vld [vmem:[#allocation8 + $0x14] sm:$0xf]
    %v249 = vld [vmem:[#allocation8 + $0x18] sm:$0xf]
    %v250 = vld [vmem:[#allocation8 + $0x1c] sm:$0xf]
    %v251 = vld [vmem:[#allocation8 + $0x20] sm:$0xf]
    %v252 = vld [vmem:[#allocation8 + $0x24] sm:$0xf]
    %v253 = vld [vmem:[#allocation8 + $0x28] sm:$0xf]
    %v254 = vld [vmem:[#allocation8 + $0x2c] sm:$0xf]
    %v255 = vld [vmem:[#allocation8 + $0x30] sm:$0xf]
    %v256 = vld [vmem:[#allocation8 + $0x34] sm:$0xf]
    %v257 = vld [vmem:[#allocation8 + $0x38] sm:$0xf]
    %v258 = vld [vmem:[#allocation8 + $0x3c] sm:$0xf]
    %v259 = vld [vmem:[#allocation2] sm:$0xff]
    %v260 = vld [vmem:[#allocation11] sm:$0xff]
    %v261 = vpack.c.bf16 %v259, %v259
    %v278 = vunpack.c.l.b16 %v243
    %v279 = vunpack.c.l.b16 %v244
    %v280 = vunpack.c.l.b16 %v245
    %v281 = vunpack.c.l.b16 %v246
    %v282 = vunpack.c.l.b16 %v247
    %v283 = vunpack.c.l.b16 %v248
    %v284 = vunpack.c.l.b16 %v249
    %v285 = vunpack.c.l.b16 %v250
    %v286 = vunpack.c.l.b16 %v251
    %v287 = vunpack.c.l.b16 %v252
    %v288 = vunpack.c.l.b16 %v253
    %v289 = vunpack.c.l.b16 %v254
    %v290 = vunpack.c.l.b16 %v255
    %v291 = vunpack.c.l.b16 %v256
    %v292 = vunpack.c.l.b16 %v257
    %v293 = vunpack.c.l.b16 %v258
    %v294 = vpack.c.b16 %v279, %v278
    %v295 = vpack.c.b16 %v281, %v280
    %v296 = vpack.c.b16 %v283, %v282
    %v297 = vpack.c.b16 %v285, %v284
    %v298 = vpack.c.b16 %v287, %v286
    %v299 = vpack.c.b16 %v289, %v288
    %v300 = vpack.c.b16 %v291, %v290
    %v301 = vpack.c.b16 %v293, %v292
    %310 = vmatprep.subr.bf16.mxu0 0
    %311 = vmatpush1.bf16.msra.mxu0 %v301
    %312 = vmatprep.subr.bf16.mxu0 0
    %313 = vmatpush1.bf16.msra.mxu0 %v300
    %314 = vmatprep.subr.bf16.mxu0 0
    %315 = vmatpush1.bf16.msra.mxu0 %v299
    %316 = vmatprep.subr.bf16.mxu0 0
    %317 = vmatpush1.bf16.msra.mxu0 %v298
    %318 = vmatprep.subr.bf16.mxu0 0
    %319 = vmatpush1.bf16.msra.mxu0 %v297
    %320 = vmatprep.subr.bf16.mxu0 0
    %321 = vmatpush1.bf16.msra.mxu0 %v296
    %322 = vmatprep.subr.bf16.mxu0 0
    %323 = vmatpush1.bf16.msra.mxu0 %v295
    %324 = vmatprep.subr.bf16.mxu0 0
    %325 = vmatpush1.bf16.msra.mxu0 %v294
    %326 = vmatprep.subr.bf16.mxu0 0
    %327 = vmatpush2.bf16.msra.mxu0 0
    %328 = vmatprep.subr.bf16.mxu0 0
    %329 = vmatpush2.bf16.msra.mxu0 0
    %330 = vmatprep.subr.bf16.mxu0 0
    %331 = vmatpush2.bf16.msra.mxu0 0
    %332 = vmatprep.subr.bf16.mxu0 0
    %333 = vmatpush2.bf16.msra.mxu0 0
    %334 = vmatprep.subr.bf16.mxu0 0
    %335 = vmatpush2.bf16.msra.mxu0 0
    %336 = vmatprep.subr.bf16.mxu0 0
    %337 = vmatpush2.bf16.msra.mxu0 0
    %338 = vmatprep.subr.bf16.mxu0 0
    %339 = vmatpush2.bf16.msra.mxu0 0
    %340 = vmatprep.subr.bf16.mxu0 0
    %341 = vmatpush2.bf16.msra.mxu0 0
    %342 = vmatprep.mubr.bf16.mxu0 0
    %343 = vmatmul.mubr.bf16.gmra.mxu0 %v261
    %v344 = vpop.f32.mrf.mxu0
    %v345 = vadd.f32 0.0, %v344
    %v346 = vpop.f32.mrf.mxu0
    %v347 = vpop.f32.mrf.mxu0
    %v348 = vpop.f32.mrf.mxu0
    %349 = vdwg.mxu0
    %v350 = vadd.f32 %v260, %v345
    %v351 = vtanh.pop %v350
    %352 = vst [vmem:[#allocation11] sm:$0xff] %v351
    %s353 = scalar_lea.vmem [#allocation11], 8
    %v354 = vld [vmem:[%s353] sm:$0xff]
    %v355 = vpack.c.bf16 %v351, %v351
    %356 = vmatprep.subr.bf16.mxu0 0
    %357 = vmatpush1.bf16.msra.mxu0 %v301
    %358 = vmatprep.subr.bf16.mxu0 0
    %359 = vmatpush1.bf16.msra.mxu0 %v300
    %360 = vmatprep.subr.bf16.mxu0 0
    %361 = vmatpush1.bf16.msra.mxu0 %v299
    %362 = vmatprep.subr.bf16.mxu0 0
    %363 = vmatpush1.bf16.msra.mxu0 %v298
    %364 = vmatprep.subr.bf16.mxu0 0
    %365 = vmatpush1.bf16.msra.mxu0 %v297
    %366 = vmatprep.subr.bf16.mxu0 0
    %367 = vmatpush1.bf16.msra.mxu0 %v296
    %368 = vmatprep.subr.bf16.mxu0 0
    %369 = vmatpush1.bf16.msra.mxu0 %v295
    %370 = vmatprep.subr.bf16.mxu0 0
    %371 = vmatpush1.bf16.msra.mxu0 %v294
    %372 = vmatprep.subr.bf16.mxu0 0
    %373 = vmatpush2.bf16.msra.mxu0 0
    %374 = vmatprep.subr.bf16.mxu0 0
    %375 = vmatpush2.bf16.msra.mxu0 0
    %376 = vmatprep.subr.bf16.mxu0 0
    %377 = vmatpush2.bf16.msra.mxu0 0
    %378 = vmatprep.subr.bf16.mxu0 0
    %379 = vmatpush2.bf16.msra.mxu0 0
    %380 = vmatprep.subr.bf16.mxu0 0
    %381 = vmatpush2.bf16.msra.mxu0 0
    %382 = vmatprep.subr.bf16.mxu0 0
    %383 = vmatpush2.bf16.msra.mxu0 0
    %384 = vmatprep.subr.bf16.mxu0 0
    %385 = vmatpush2.bf16.msra.mxu0 0
    %386 = vmatprep.subr.bf16.mxu0 0
    %387 = vmatpush2.bf16.msra.mxu0 0
    %388 = vmatprep.mubr.bf16.mxu0 0
    %389 = vmatmul.mubr.bf16.gmra.mxu0 %v355
    %v390 = vpop.f32.mrf.mxu0
    %v391 = vadd.f32 0.0, %v390
    %v392 = vpop.f32.mrf.mxu0
    %v393 = vpop.f32.mrf.mxu0
    %v394 = vpop.f32.mrf.mxu0
    %395 = vdwg.mxu0
    %v396 = vadd.f32 %v354, %v391
    %v397 = vtanh.pop %v396
    %398 = vst [vmem:[%s353] sm:$0xff] %v397
    %s399 = scalar_lea.vmem [#allocation11], 16
    %v400 = vld [vmem:[%s399] sm:$0xff]
    %v401 = vpack.c.bf16 %v397, %v397
    %402 = vmatprep.subr.bf16.mxu0 0
    %403 = vmatpush1.bf16.msra.mxu0 %v301
    %404 = vmatprep.subr.bf16.mxu0 0
    %405 = vmatpush1.bf16.msra.mxu0 %v300
    %406 = vmatprep.subr.bf16.mxu0 0
    %407 = vmatpush1.bf16.msra.mxu0 %v299
    %408 = vmatprep.subr.bf16.mxu0 0
    %409 = vmatpush1.bf16.msra.mxu0 %v298
    %410 = vmatprep.subr.bf16.mxu0 0
    %411 = vmatpush1.bf16.msra.mxu0 %v297
    %412 = vmatprep.subr.bf16.mxu0 0
    %413 = vmatpush1.bf16.msra.mxu0 %v296
    %414 = vmatprep.subr.bf16.mxu0 0
    %415 = vmatpush1.bf16.msra.mxu0 %v295
    %416 = vmatprep.subr.bf16.mxu0 0
    %417 = vmatpush1.bf16.msra.mxu0 %v294
    %418 = vmatprep.subr.bf16.mxu0 0
    %419 = vmatpush2.bf16.msra.mxu0 0
    %420 = vmatprep.subr.bf16.mxu0 0
    %421 = vmatpush2.bf16.msra.mxu0 0
    %422 = vmatprep.subr.bf16.mxu0 0
    %423 = vmatpush2.bf16.msra.mxu0 0
    %424 = vmatprep.subr.bf16.mxu0 0
    %425 = vmatpush2.bf16.msra.mxu0 0
    %426 = vmatprep.subr.bf16.mxu0 0
    %427 = vmatpush2.bf16.msra.mxu0 0
    %428 = vmatprep.subr.bf16.mxu0 0
    %429 = vmatpush2.bf16.msra.mxu0 0
    %430 = vmatprep.subr.bf16.mxu0 0
    %431 = vmatpush2.bf16.msra.mxu0 0
    %432 = vmatprep.subr.bf16.mxu0 0
    %433 = vmatpush2.bf16.msra.mxu0 0
    %434 = vmatprep.mubr.bf16.mxu0 0
    %435 = vmatmul.mubr.bf16.gmra.mxu0 %v401
    %v436 = vpop.f32.mrf.mxu0
    %v437 = vadd.f32 0.0, %v436
    %v438 = vpop.f32.mrf.mxu0
    %v439 = vpop.f32.mrf.mxu0
    %v440 = vpop.f32.mrf.mxu0
    %441 = vdwg.mxu0
    %v442 = vadd.f32 %v400, %v437
    %v443 = vtanh.pop %v442
    %444 = vst [vmem:[%s399] sm:$0xff] %v443
    %s445 = scalar_lea.vmem [#allocation11], 24
    %v446 = vld [vmem:[%s445] sm:$0xff]
    %v447 = vpack.c.bf16 %v443, %v443
    %448 = vmatprep.subr.bf16.mxu0 0
    %449 = vmatpush1.bf16.msra.mxu0 %v301
    %450 = vmatprep.subr.bf16.mxu0 0
    %451 = vmatpush1.bf16.msra.mxu0 %v300
    %452 = vmatprep.subr.bf16.mxu0 0
    %453 = vmatpush1.bf16.msra.mxu0 %v299
    %454 = vmatprep.subr.bf16.mxu0 0
    %455 = vmatpush1.bf16.msra.mxu0 %v298
    %456 = vmatprep.subr.bf16.mxu0 0
    %457 = vmatpush1.bf16.msra.mxu0 %v297
    %458 = vmatprep.subr.bf16.mxu0 0
    %459 = vmatpush1.bf16.msra.mxu0 %v296
    %460 = vmatprep.subr.bf16.mxu0 0
    %461 = vmatpush1.bf16.msra.mxu0 %v295
    %462 = vmatprep.subr.bf16.mxu0 0
    %463 = vmatpush1.bf16.msra.mxu0 %v294
    %464 = vmatprep.subr.bf16.mxu0 0
    %465 = vmatpush2.bf16.msra.mxu0 0
    %466 = vmatprep.subr.bf16.mxu0 0
    %467 = vmatpush2.bf16.msra.mxu0 0
    %468 = vmatprep.subr.bf16.mxu0 0
    %469 = vmatpush2.bf16.msra.mxu0 0
    %470 = vmatprep.subr.bf16.mxu0 0
    %471 = vmatpush2.bf16.msra.mxu0 0
    %472 = vmatprep.subr.bf16.mxu0 0
    %473 = vmatpush2.bf16.msra.mxu0 0
    %474 = vmatprep.subr.bf16.mxu0 0
    %475 = vmatpush2.bf16.msra.mxu0 0
    %476 = vmatprep.subr.bf16.mxu0 0
    %477 = vmatpush2.bf16.msra.mxu0 0
    %478 = vmatprep.subr.bf16.mxu0 0
    %479 = vmatpush2.bf16.msra.mxu0 0
    %480 = vmatprep.mubr.bf16.mxu0 0
    %481 = vmatmul.mubr.bf16.gmra.mxu0 %v447
    %v482 = vpop.f32.mrf.mxu0
    %v483 = vadd.f32 0.0, %v482
    %v484 = vpop.f32.mrf.mxu0
    %v485 = vpop.f32.mrf.mxu0
    %v486 = vpop.f32.mrf.mxu0
    %487 = vdwg.mxu0
    %v488 = vadd.f32 %v446, %v483
    %v489 = vtanh.pop %v488
    %490 = vst [vmem:[%s445] sm:$0xff] %v489
    %s491 = scalar_lea.vmem [#allocation11], 32
    %v492 = vld [vmem:[%s491] sm:$0xff]
    %v493 = vpack.c.bf16 %v489, %v489
    %494 = vmatprep.subr.bf16.mxu0 0
    %495 = vmatpush1.bf16.msra.mxu0 %v301
    %496 = vmatprep.subr.bf16.mxu0 0
    %497 = vmatpush1.bf16.msra.mxu0 %v300
    %498 = vmatprep.subr.bf16.mxu0 0
    %499 = vmatpush1.bf16.msra.mxu0 %v299
    %500 = vmatprep.subr.bf16.mxu0 0
    %501 = vmatpush1.bf16.msra.mxu0 %v298
    %502 = vmatprep.subr.bf16.mxu0 0
    %503 = vmatpush1.bf16.msra.mxu0 %v297
    %504 = vmatprep.subr.bf16.mxu0 0
    %505 = vmatpush1.bf16.msra.mxu0 %v296
    %506 = vmatprep.subr.bf16.mxu0 0
    %507 = vmatpush1.bf16.msra.mxu0 %v295
    %508 = vmatprep.subr.bf16.mxu0 0
    %509 = vmatpush1.bf16.msra.mxu0 %v294
    %510 = vmatprep.subr.bf16.mxu0 0
    %511 = vmatpush2.bf16.msra.mxu0 0
    %512 = vmatprep.subr.bf16.mxu0 0
    %513 = vmatpush2.bf16.msra.mxu0 0
    %514 = vmatprep.subr.bf16.mxu0 0
    %515 = vmatpush2.bf16.msra.mxu0 0
    %516 = vmatprep.subr.bf16.mxu0 0
    %517 = vmatpush2.bf16.msra.mxu0 0
    %518 = vmatprep.subr.bf16.mxu0 0
    %519 = vmatpush2.bf16.msra.mxu0 0
    %520 = vmatprep.subr.bf16.mxu0 0
    %521 = vmatpush2.bf16.msra.mxu0 0
    %522 = vmatprep.subr.bf16.mxu0 0
    %523 = vmatpush2.bf16.msra.mxu0 0
    %524 = vmatprep.subr.bf16.mxu0 0
    %525 = vmatpush2.bf16.msra.mxu0 0
    %526 = vmatprep.mubr.bf16.mxu0 0
    %527 = vmatmul.mubr.bf16.gmra.mxu0 %v493
    %v528 = vpop.f32.mrf.mxu0
    %v529 = vadd.f32 0.0, %v528
    %v530 = vpop.f32.mrf.mxu0
    %v531 = vpop.f32.mrf.mxu0
    %v532 = vpop.f32.mrf.mxu0
    %533 = vdwg.mxu0
    %v534 = vadd.f32 %v492, %v529
    %v535 = vtanh.pop %v534
    %536 = vst [vmem:[%s491] sm:$0xff] %v535
    %s537 = scalar_lea.vmem [#allocation11], 40
    %v538 = vld [vmem:[%s537] sm:$0xff]
    %v539 = vpack.c.bf16 %v535, %v535
    %540 = vmatprep.subr.bf16.mxu0 0
    %541 = vmatpush1.bf16.msra.mxu0 %v301
    %542 = vmatprep.subr.bf16.mxu0 0
    %543 = vmatpush1.bf16.msra.mxu0 %v300
    %544 = vmatprep.subr.bf16.mxu0 0
    %545 = vmatpush1.bf16.msra.mxu0 %v299
    %546 = vmatprep.subr.bf16.mxu0 0
    %547 = vmatpush1.bf16.msra.mxu0 %v298
    %548 = vmatprep.subr.bf16.mxu0 0
    %549 = vmatpush1.bf16.msra.mxu0 %v297
    %550 = vmatprep.subr.bf16.mxu0 0
    %551 = vmatpush1.bf16.msra.mxu0 %v296
    %552 = vmatprep.subr.bf16.mxu0 0
    %553 = vmatpush1.bf16.msra.mxu0 %v295
    %554 = vmatprep.subr.bf16.mxu0 0
    %555 = vmatpush1.bf16.msra.mxu0 %v294
    %556 = vmatprep.subr.bf16.mxu0 0
    %557 = vmatpush2.bf16.msra.mxu0 0
    %558 = vmatprep.subr.bf16.mxu0 0
    %559 = vmatpush2.bf16.msra.mxu0 0
    %560 = vmatprep.subr.bf16.mxu0 0
    %561 = vmatpush2.bf16.msra.mxu0 0
    %562 = vmatprep.subr.bf16.mxu0 0
    %563 = vmatpush2.bf16.msra.mxu0 0
    %564 = vmatprep.subr.bf16.mxu0 0
    %565 = vmatpush2.bf16.msra.mxu0 0
    %566 = vmatprep.subr.bf16.mxu0 0
    %567 = vmatpush2.bf16.msra.mxu0 0
    %568 = vmatprep.subr.bf16.mxu0 0
    %569 = vmatpush2.bf16.msra.mxu0 0
    %570 = vmatprep.subr.bf16.mxu0 0
    %571 = vmatpush2.bf16.msra.mxu0 0
    %572 = vmatprep.mubr.bf16.mxu0 0
    %573 = vmatmul.mubr.bf16.gmra.mxu0 %v539
    %v574 = vpop.f32.mrf.mxu0
    %v575 = vadd.f32 0.0, %v574
    %v576 = vpop.f32.mrf.mxu0
    %v577 = vpop.f32.mrf.mxu0
    %v578 = vpop.f32.mrf.mxu0
    %579 = vdwg.mxu0
    %v580 = vadd.f32 %v538, %v575
    %v581 = vtanh.pop %v580
    %582 = vst [vmem:[%s537] sm:$0xff] %v581
    %s583 = scalar_lea.vmem [#allocation11], 48
    %v584 = vld [vmem:[%s583] sm:$0xff]
    %v585 = vpack.c.bf16 %v581, %v581
    %586 = vmatprep.subr.bf16.mxu0 0
    %587 = vmatpush1.bf16.msra.mxu0 %v301
    %588 = vmatprep.subr.bf16.mxu0 0
    %589 = vmatpush1.bf16.msra.mxu0 %v300
    %590 = vmatprep.subr.bf16.mxu0 0
    %591 = vmatpush1.bf16.msra.mxu0 %v299
    %592 = vmatprep.subr.bf16.mxu0 0
    %593 = vmatpush1.bf16.msra.mxu0 %v298
    %594 = vmatprep.subr.bf16.mxu0 0
    %595 = vmatpush1.bf16.msra.mxu0 %v297
    %596 = vmatprep.subr.bf16.mxu0 0
    %597 = vmatpush1.bf16.msra.mxu0 %v296
    %598 = vmatprep.subr.bf16.mxu0 0
    %599 = vmatpush1.bf16.msra.mxu0 %v295
    %600 = vmatprep.subr.bf16.mxu0 0
    %601 = vmatpush1.bf16.msra.mxu0 %v294
    %602 = vmatprep.subr.bf16.mxu0 0
    %603 = vmatpush2.bf16.msra.mxu0 0
    %604 = vmatprep.subr.bf16.mxu0 0
    %605 = vmatpush2.bf16.msra.mxu0 0
    %606 = vmatprep.subr.bf16.mxu0 0
    %607 = vmatpush2.bf16.msra.mxu0 0
    %608 = vmatprep.subr.bf16.mxu0 0
    %609 = vmatpush2.bf16.msra.mxu0 0
    %610 = vmatprep.subr.bf16.mxu0 0
    %611 = vmatpush2.bf16.msra.mxu0 0
    %612 = vmatprep.subr.bf16.mxu0 0
    %613 = vmatpush2.bf16.msra.mxu0 0
    %614 = vmatprep.subr.bf16.mxu0 0
    %615 = vmatpush2.bf16.msra.mxu0 0
    %616 = vmatprep.subr.bf16.mxu0 0
    %617 = vmatpush2.bf16.msra.mxu0 0
    %618 = vmatprep.mubr.bf16.mxu0 0
    %619 = vmatmul.mubr.bf16.gmra.mxu0 %v585
    %v620 = vpop.f32.mrf.mxu0
    %v621 = vadd.f32 0.0, %v620
    %v622 = vpop.f32.mrf.mxu0
    %v623 = vpop.f32.mrf.mxu0
    %v624 = vpop.f32.mrf.mxu0
    %625 = vdwg.mxu0
    %v626 = vadd.f32 %v584, %v621
    %v627 = vtanh.pop %v626
    %628 = vst [vmem:[%s583] sm:$0xff] %v627
    %s629 = scalar_lea.vmem [#allocation11], 56
    %v630 = vld [vmem:[%s629] sm:$0xff]
    %v631 = vpack.c.bf16 %v627, %v627
    %632 = vmatprep.subr.bf16.mxu0 0
    %633 = vmatpush1.bf16.msra.mxu0 %v301
    %634 = vmatprep.subr.bf16.mxu0 0
    %635 = vmatpush1.bf16.msra.mxu0 %v300
    %636 = vmatprep.subr.bf16.mxu0 0
    %637 = vmatpush1.bf16.msra.mxu0 %v299
    %638 = vmatprep.subr.bf16.mxu0 0
    %639 = vmatpush1.bf16.msra.mxu0 %v298
    %640 = vmatprep.subr.bf16.mxu0 0
    %641 = vmatpush1.bf16.msra.mxu0 %v297
    %642 = vmatprep.subr.bf16.mxu0 0
    %643 = vmatpush1.bf16.msra.mxu0 %v296
    %644 = vmatprep.subr.bf16.mxu0 0
    %645 = vmatpush1.bf16.msra.mxu0 %v295
    %646 = vmatprep.subr.bf16.mxu0 0
    %647 = vmatpush1.bf16.msra.mxu0 %v294
    %648 = vmatprep.subr.bf16.mxu0 0
    %649 = vmatpush2.bf16.msra.mxu0 0
    %650 = vmatprep.subr.bf16.mxu0 0
    %651 = vmatpush2.bf16.msra.mxu0 0
    %652 = vmatprep.subr.bf16.mxu0 0
    %653 = vmatpush2.bf16.msra.mxu0 0
    %654 = vmatprep.subr.bf16.mxu0 0
    %655 = vmatpush2.bf16.msra.mxu0 0
    %656 = vmatprep.subr.bf16.mxu0 0
    %657 = vmatpush2.bf16.msra.mxu0 0
    %658 = vmatprep.subr.bf16.mxu0 0
    %659 = vmatpush2.bf16.msra.mxu0 0
    %660 = vmatprep.subr.bf16.mxu0 0
    %661 = vmatpush2.bf16.msra.mxu0 0
    %662 = vmatprep.subr.bf16.mxu0 0
    %663 = vmatpush2.bf16.msra.mxu0 0
    %664 = vmatprep.mubr.bf16.mxu0 0
    %665 = vmatmul.mubr.bf16.gmra.mxu0 %v631
    %v666 = vpop.f32.mrf.mxu0
    %v667 = vadd.f32 0.0, %v666
    %v668 = vpop.f32.mrf.mxu0
    %v669 = vpop.f32.mrf.mxu0
    %v670 = vpop.f32.mrf.mxu0
    %671 = vdwg.mxu0
    %v672 = vadd.f32 %v630, %v667
    %v673 = vtanh.pop %v672
    %674 = vst [vmem:[%s629] sm:$0xff] %v673
    %675 = vst [vmem:[#allocation2] sm:$0xff] %v673
    %v676 = vld [vmem:[#allocation11] sm:$0xff]
    %v677 = vld [vmem:[#allocation11 + $0x8] sm:$0xff]
    %v678 = vld [vmem:[#allocation11 + $0x10] sm:$0xff]
    %v679 = vld [vmem:[#allocation11 + $0x18] sm:$0xff]
    %v680 = vld [vmem:[#allocation11 + $0x20] sm:$0xff]
    %v681 = vld [vmem:[#allocation11 + $0x28] sm:$0xff]
    %v682 = vld [vmem:[#allocation11 + $0x30] sm:$0xff]
    %v683 = vld [vmem:[#allocation11 + $0x38] sm:$0xff]
    %v684 = vld [vmem:[#allocation9] sm:$0xff]
    %v685 = vld [vmem:[#allocation9 + $0x8] sm:$0xff]
    %v686 = vld [vmem:[#allocation9 + $0x10] sm:$0xff]
    %v687 = vld [vmem:[#allocation9 + $0x18] sm:$0xff]
    %v688 = vld [vmem:[#allocation9 + $0x20] sm:$0xff]
    %v689 = vld [vmem:[#allocation9 + $0x28] sm:$0xff]
    %v690 = vld [vmem:[#allocation9 + $0x30] sm:$0xff]
    %v691 = vld [vmem:[#allocation9 + $0x38] sm:$0xff]
    %v692 = vld [vmem:[#allocation9 + $0x40] sm:$0xff]
    %v693 = vld [vmem:[#allocation9 + $0x48] sm:$0xff]
    %v694 = vld [vmem:[#allocation9 + $0x50] sm:$0xff]
    %v695 = vld [vmem:[#allocation9 + $0x58] sm:$0xff]
    %v696 = vld [vmem:[#allocation9 + $0x60] sm:$0xff]
    %v697 = vld [vmem:[#allocation9 + $0x68] sm:$0xff]
    %v698 = vld [vmem:[#allocation9 + $0x70] sm:$0xff]
    %v699 = vld [vmem:[#allocation9 + $0x78] sm:$0xff]
    %v700 = vld [vmem:[%s5] sm:$0x1]
    %v702 = vlaneseq
    %v703 = vshrl.u32 %v702, 7
    %v704 = vsub.s32 0, %v703
    %v705 = vrot.slane %v700, %v704
    %707 = vmatprep.subr.mxu0 0.0
    %708 = vmatpush1.msra.mxu0 %v699
    %709 = vmatprep.subr.mxu0 0.0
    %710 = vmatpush1.msra.mxu0 %v698
    %711 = vmatprep.subr.mxu0 0.0
    %712 = vmatpush1.msra.mxu0 %v697
    %713 = vmatprep.subr.mxu0 0.0
    %714 = vmatpush1.msra.mxu0 %v696
    %715 = vmatprep.subr.mxu0 0.0
    %716 = vmatpush1.msra.mxu0 %v695
    %717 = vmatprep.subr.mxu0 0.0
    %718 = vmatpush1.msra.mxu0 %v694
    %719 = vmatprep.subr.mxu0 0.0
    %720 = vmatpush1.msra.mxu0 %v693
    %721 = vmatprep.subr.mxu0 0.0
    %722 = vmatpush1.msra.mxu0 %v692
    %723 = vmatprep.subr.mxu0 0.0
    %724 = vmatpush1.msra.mxu0 %v691
    %725 = vmatprep.subr.mxu0 0.0
    %726 = vmatpush1.msra.mxu0 %v690
    %727 = vmatprep.subr.mxu0 0.0
    %728 = vmatpush1.msra.mxu0 %v689
    %729 = vmatprep.subr.mxu0 0.0
    %730 = vmatpush1.msra.mxu0 %v688
    %731 = vmatprep.subr.mxu0 0.0
    %732 = vmatpush1.msra.mxu0 %v687
    %733 = vmatprep.subr.mxu0 0.0
    %734 = vmatpush1.msra.mxu0 %v686
    %735 = vmatprep.subr.mxu0 0.0
    %736 = vmatpush1.msra.mxu0 %v685
    %737 = vmatprep.subr.mxu0 0.0
    %738 = vmatpush1.msra.mxu0 %v684
    %739 = vmatprep.subr.mxu0 0.0
    %740 = vmatpush2.msra.mxu0 0.0
    %741 = vmatprep.subr.mxu0 0.0
    %742 = vmatpush2.msra.mxu0 0.0
    %743 = vmatprep.subr.mxu0 0.0
    %744 = vmatpush2.msra.mxu0 0.0
    %745 = vmatprep.subr.mxu0 0.0
    %746 = vmatpush2.msra.mxu0 0.0
    %747 = vmatprep.subr.mxu0 0.0
    %748 = vmatpush2.msra.mxu0 0.0
    %749 = vmatprep.subr.mxu0 0.0
    %750 = vmatpush2.msra.mxu0 0.0
    %751 = vmatprep.subr.mxu0 0.0
    %752 = vmatpush2.msra.mxu0 0.0
    %753 = vmatprep.subr.mxu0 0.0
    %754 = vmatpush2.msra.mxu0 0.0
    %755 = vmatprep.subr.mxu0 0.0
    %756 = vmatpush2.msra.mxu0 0.0
    %757 = vmatprep.subr.mxu0 0.0
    %758 = vmatpush2.msra.mxu0 0.0
    %759 = vmatprep.subr.mxu0 0.0
    %760 = vmatpush2.msra.mxu0 0.0
    %761 = vmatprep.subr.mxu0 0.0
    %762 = vmatpush2.msra.mxu0 0.0
    %763 = vmatprep.subr.mxu0 0.0
    %764 = vmatpush2.msra.mxu0 0.0
    %765 = vmatprep.subr.mxu0 0.0
    %766 = vmatpush2.msra.mxu0 0.0
    %767 = vmatprep.subr.mxu0 0.0
    %768 = vmatpush2.msra.mxu0 0.0
    %769 = vmatprep.subr.mxu0 0.0
    %770 = vmatpush2.msra.mxu0 0.0
    %771 = vmatprep.mubr.f32.mxu0 0.0
    %772 = vmatmul.mubr.f32.gmra.mxu0 %v676
    %v773 = vpop.f32.mrf.mxu0
    %v774 = vadd.f32 %v705, %v773
    %v775 = vpop.f32.mrf.mxu0
    %776 = vmatprep.mubr.f32.mxu0 0.0
    %777 = vmatmul.mubr.f32.gmra.mxu0 %v677
    %v778 = vpop.f32.mrf.mxu0
    %v779 = vadd.f32 %v705, %v778
    %v780 = vpop.f32.mrf.mxu0
    %781 = vmatprep.mubr.f32.mxu0 0.0
    %782 = vmatmul.mubr.f32.gmra.mxu0 %v678
    %v783 = vpop.f32.mrf.mxu0
    %v784 = vadd.f32 %v705, %v783
    %v785 = vpop.f32.mrf.mxu0
    %786 = vmatprep.mubr.f32.mxu0 0.0
    %787 = vmatmul.mubr.f32.gmra.mxu0 %v679
    %v788 = vpop.f32.mrf.mxu0
    %v789 = vadd.f32 %v705, %v788
    %v790 = vpop.f32.mrf.mxu0
    %791 = vmatprep.mubr.f32.mxu0 0.0
    %792 = vmatmul.mubr.f32.gmra.mxu0 %v680
    %v793 = vpop.f32.mrf.mxu0
    %v794 = vadd.f32 %v705, %v793
    %v795 = vpop.f32.mrf.mxu0
    %796 = vmatprep.mubr.f32.mxu0 0.0
    %797 = vmatmul.mubr.f32.gmra.mxu0 %v681
    %v798 = vpop.f32.mrf.mxu0
    %v799 = vadd.f32 %v705, %v798
    %v800 = vpop.f32.mrf.mxu0
    %801 = vmatprep.mubr.f32.mxu0 0.0
    %802 = vmatmul.mubr.f32.gmra.mxu0 %v682
    %v803 = vpop.f32.mrf.mxu0
    %v804 = vadd.f32 %v705, %v803
    %v805 = vpop.f32.mrf.mxu0
    %806 = vmatprep.mubr.f32.mxu0 0.0
    %807 = vmatmul.mubr.f32.gmra.mxu0 %v683
    %v808 = vpop.f32.mrf.mxu0
    %v809 = vadd.f32 %v705, %v808
    %v810 = vpop.f32.mrf.mxu0
    %811 = vdwg.mxu0
    %812 = vst [vmem:[#allocation12] sm:$0xff] %v774
    %813 = vst [vmem:[#allocation12 + $0x8] sm:$0xff] %v779
    %814 = vst [vmem:[#allocation12 + $0x10] sm:$0xff] %v784
    %815 = vst [vmem:[#allocation12 + $0x18] sm:$0xff] %v789
    %816 = vst [vmem:[#allocation12 + $0x20] sm:$0xff] %v794
    %817 = vst [vmem:[#allocation12 + $0x28] sm:$0xff] %v799
    %818 = vst [vmem:[#allocation12 + $0x30] sm:$0xff] %v804
    %819 = vst [vmem:[#allocation12 + $0x38] sm:$0xff] %v809
    // Predicated region
    $region46: #{tpu_custom_call.1} parent=1 // pred_check
      _
    $region47: #{tpu_custom_call.1} parent=1 // pred_check_branch
      %821 = sbr.rel (0) target = $region49
    $region48: #{tpu_custom_call.1} parent=1 // pred_region
      %s823 = ssub.s32 1024, 1024
      %824 = vsyncadd [#allocation5], %s823
      %s825 = sshll.u32 [#allocation11], 4
      %s826 = int_to_ptr.vmem [resolvable:$true] %s825
      %831 = dma.vmem_to_hbm [thread:$0]  %s826, 1024, %s6, [#allocation5], 128, 128, 8
    $region49: #{tpu_custom_call.1} parent=1 // pred_fallthru
      _
    // Predicated region
    $region50: #{tpu_custom_call.1} parent=1 // pred_check
      _
    $region51: #{tpu_custom_call.1} parent=1 // pred_check_branch
      %833 = sbr.rel (0) target = $region53
    $region52: #{tpu_custom_call.1} parent=1 // pred_region
      %s835 = ssub.s32 1024, 1024
      %836 = vsyncadd [#allocation13], %s835
      %s837 = sshll.u32 [#allocation12], 4
      %s838 = int_to_ptr.vmem [resolvable:$true] %s837
      %843 = dma.vmem_to_hbm [thread:$0]  %s838, 1024, %s7, [#allocation13], 128, 128, 8
    $region53: #{tpu_custom_call.1} parent=1 // pred_fallthru
      _
    // Predicated region
    $region54: #{tpu_custom_call.1} parent=1 // pred_check
      _
    $region55: #{tpu_custom_call.1} parent=1 // pred_check_branch
      %845 = sbr.rel (0) target = $region57
    $region56: #{tpu_custom_call.1} parent=1 // pred_region
      %846 = dma.done [#allocation5], 1024
    $region57: #{tpu_custom_call.1} parent=1 // pred_fallthru
      _
    // Predicated region
    $region58: #{tpu_custom_call.1} parent=1 // pred_check
      _
    $region59: #{tpu_custom_call.1} parent=1 // pred_check_branch
      %848 = sbr.rel (0) target = $region61
    $region60: #{tpu_custom_call.1} parent=1 // pred_region
      %849 = dma.done [#allocation13], 1024
    $region61: #{tpu_custom_call.1} parent=1 // pred_fallthru
      _
    %850 = vsyncpa [#allocation4], 1
    %851 = vsyncpa [#allocation7], 1
    %852 = vsyncpa [#allocation10], 1
    %853 = vsyncpa [#allocation5], 1
    %854 = vsyncpa [#allocation13], 1

</llo_original>
